<compile_context>
chip_gen: v7x
topology: tpu7x:2x2x1
jax: 0.10.0
libtpu: 0.0.40
codegen_flags: <defaults>
</compile_context>

<pallas_src>
import functools

import jax
import jax.numpy as jnp
import numpy as np
from jax.experimental import pallas as pl
from jax.experimental.pallas import tpu as pltpu

NORM_EPS = 1e-5
GATE_EPS = 1e-4


# --------------------------------- kernel ----------------------------------
def _minlstm_stack_kernel(x_ref, rms_ref, wall_ref, wo_ref, o_ref, *, seq_len):
    """One grid step = (batch tile, layer); all layers fused in one call.

    The residual stream lives in o_ref (its block index is independent of the
    layer axis), so it stays resident in VMEM across all layers of a tile.
    All tensors are 2-D: rows = bt * seq_len, lanes = feature dim.
    """
    layer = pl.program_id(1)

    # Layer 0: seed the VMEM-resident residual stream from the (aliased) input.
    @pl.when(layer == 0)
    def _():
        o_ref[...] = x_ref[...]

    x = o_ref[...]                                   # (R, D) f32 residual
    R, D = x.shape
    H = wo_ref.shape[0]
    S = seq_len

    # ---- RMSNorm (f32) -----------------------------------------------------
    ms = jnp.mean(x * x, axis=-1, keepdims=True)
    xn = x * jax.lax.rsqrt(ms + NORM_EPS) * rms_ref[...]        # (R, D)

    # ---- fused input projection [W | Wfi | Wh~] : one 2-D MXU pass ----------
    # bf16 operands, f32 accumulation.
    proj = jnp.dot(xn.astype(jnp.bfloat16), wall_ref[...],
                   preferred_element_type=jnp.float32)          # (R, 4H)

    w0 = proj[:, 0:H]                           # output-gate pre-activation
    f = jax.nn.sigmoid(proj[:, H:2 * H])        # forget gate
    i = jax.nn.sigmoid(proj[:, 2 * H:3 * H])    # input gate
    ht = proj[:, 3 * H:4 * H]                   # candidate h~

    # EUP reciprocal (free VLIW slot) instead of a VALU divide.
    denom = pl.reciprocal(f + i + GATE_EPS, approx=True)
    a = f * denom                               # h_t = a_t * h_{t-1} + b_t
    b = ht * i * denom

    # ---- associative scan over time: log2(S) stages of roll + select --------
    # Rows are bt concatenated length-S sequences; position within a sequence
    # is (row % S).  Shifted operands come from an XLU sublane roll; positions
    # that would read across a sequence (or block) boundary are masked to the
    # identity (1 for a, 0 for b), so wrap-around values never contribute.
    t_idx = jax.lax.broadcasted_iota(jnp.int32, (R, H), 0) % S   # hoisted once
    d = 1
    while d < S:
        m = t_idx >= d
        a_prev = jnp.where(m, pltpu.roll(a, shift=d, axis=0), 1.0)
        b_prev = jnp.where(m, pltpu.roll(b, shift=d, axis=0), 0.0)
        b = a * b_prev + b
        a = a * a_prev
        d *= 2
    h = b                                        # (R, H), h_t inclusive scan

    # ---- output gate + down-projection + residual ---------------------------
    g = (h * (w0 * jax.nn.sigmoid(w0))).astype(jnp.bfloat16)     # h * silu(w0)
    out = jnp.dot(g, wo_ref[...], preferred_element_type=jnp.float32)  # (R, D)
    o_ref[...] = x + out


# ----------------------------- tiling heuristics ----------------------------
def _vmem_budget_bytes():
    # ~3/4 of the per-TensorCore VMEM capacity: ~48 MiB on v7x (64 MiB parts),
    # ~96 MiB on v5e/v6e (128 MiB parts).  Leaves headroom for compiler scratch.
    try:
        cap = int(pltpu.get_tpu_info().vmem_capacity_bytes)
    except Exception:  # pragma: no cover - conservative fallback
        cap = 64 * 1024 * 1024
    return (cap * 3) // 4


def _tile_vmem_bytes(bt, S, D, H):
    """Rough VMEM footprint of one grid step for batch tile size bt."""
    R = bt * S
    io_blk = R * D * 4                       # x / out block (f32)
    wall = D * 4 * H * 2                     # fused projection weight (bf16)
    wo = H * D * 2                           # down projection weight (bf16)
    rms = D * 4
    pipelined = 2 * (io_blk + wall + wo + rms) + 2 * io_blk   # double buffers
    # Largest in-kernel live set (rough): proj (4H) + ~6 scan/gate temps (H)
    # + x/out temps (2D), all f32.
    temps = R * (4 * H + 6 * H + 2 * D) * 4
    return pipelined + temps


def _pick_batch_tile(B, S, D, H, budget, target_rows=512):
    """Pick bt | B s.t. bt*S >= target_rows if possible (amortize weight DMA),
    the tile fits the VMEM budget, and >= 2 programs remain on the parallel
    batch axis when B >= 2 (v7x has 2 TensorCores per chip)."""
    divisors = [d for d in range(1, B + 1) if B % d == 0]
    cands = [d for d in divisors if B // d >= 2] or divisors
    fit = [d for d in cands if _tile_vmem_bytes(d, S, D, H) <= budget]
    if not fit:
        return min(divisors)
    meets = [d for d in fit if d * S >= target_rows]
    return min(meets) if meets else max(fit)


# --------------------------------- wrapper ----------------------------------
@jax.jit
def base_min_lstm_forward(x, params):
    """x: (B, S, D) f32.  params: stacked per-layer weights (see init_params)."""
    B, S, D = x.shape
    rms, w_all, wo = params["rms"], params["w_all"], params["wo"]
    L, H = wo.shape[0], wo.shape[1]
    assert w_all.shape == (L, D, 4 * H) and rms.shape == (L, 1, D)
    # Lane-dense gate slices / stores and sublane-aligned sequences:
    assert D % 128 == 0, "dim must be a multiple of 128"
    assert H % 128 == 0, "hidden_dim must be a multiple of 128"
    assert S % 8 == 0, "seq_len must be a multiple of 8"

    budget = _vmem_budget_bytes()
    bt = _pick_batch_tile(B, S, D, H, budget)
    nb = B // bt
    R = bt * S

    # Flatten to 2-D rows so the kernel works on plain (rows, lanes) tiles.
    x2 = x.reshape(B * S, D)
    kernel = functools.partial(_minlstm_stack_kernel, seq_len=S)

    y2 = pl.pallas_call(
        kernel,
        out_shape=jax.ShapeDtypeStruct((B * S, D), jnp.float32),
        grid_spec=pltpu.PrefetchScalarGridSpec(
            num_scalar_prefetch=0,
            grid=(nb, L),                                 # layer axis innermost
            in_specs=[
                pl.BlockSpec((R, D), lambda r, l: (r, 0)),            # x (aliased)
                pl.BlockSpec((None, 1, D), lambda r, l: (l, 0, 0)),   # rms weight
                pl.BlockSpec((None, D, 4 * H), lambda r, l: (l, 0, 0)),  # W|Wfi|Wh~
                pl.BlockSpec((None, H, D), lambda r, l: (l, 0, 0)),      # Wo
            ],
            out_specs=pl.BlockSpec((R, D), lambda r, l: (r, 0)),
        ),
        compiler_params=pltpu.CompilerParams(
            dimension_semantics=("parallel", "arbitrary"),
            vmem_limit_bytes=int(budget),
        ),
        input_output_aliases={0: 0},                      # donate x to output
    )(x2, rms, w_all, wo)
    return y2.reshape(B, S, D)


# ------------------------------ parameter init ------------------------------
def _trunc_normal(key, shape, std):
    return jax.random.truncated_normal(key, -3.0, 3.0, shape, jnp.float32) * std


def hidden_dim_for(dim, multiple_of):
    # LSTMBlock passes hidden_dim = 3*dim; LSTM.__init__: int(2*h/3) then round.
    h = int(2 * (3 * dim) / 3)
    return multiple_of * ((h + multiple_of - 1) // multiple_of)


def init_params(key, dim, n_layers, multiple_of):
    H = hidden_dim_for(dim, multiple_of)
    in_std = dim ** -0.5
    out_std = H ** -0.5            # init_std_factor = 'disabled' -> factor 1.0
    rms_l, wall_l, wo_l = [], [], []
    for _ in range(n_layers):
        key, k1, k2, k3, k4 = jax.random.split(key, 5)
        w = _trunc_normal(k1, (dim, H), in_std)
        wfi = _trunc_normal(k2, (dim, 2 * H), in_std)
        wh = _trunc_normal(k3, (dim, H), in_std)
        wo = _trunc_normal(k4, (H, dim), out_std)
        rms_l.append(jnp.ones((1, dim), jnp.float32))
        # Fused [W | Wfi | Wh~] projection weight, stored bf16 for the MXU.
        wall_l.append(jnp.concatenate([w, wfi, wh], axis=1).astype(jnp.bfloat16))
        wo_l.append(wo.astype(jnp.bfloat16))
    return {
        "rms": jnp.stack(rms_l),      # (L, 1, D)   f32
        "w_all": jnp.stack(wall_l),   # (L, D, 4H)  bf16
        "wo": jnp.stack(wo_l),        # (L, H, D)   bf16
    }


# ----------------------------- pure-JAX reference ----------------------------
def _ref_forward(x, params):
    hp = jax.lax.Precision.HIGHEST
    rms_s = params["rms"]
    wall_s = params["w_all"].astype(jnp.float32)
    wo_s = params["wo"].astype(jnp.float32)
    L, H = wo_s.shape[0], wo_s.shape[1]
    for l in range(L):
        ms = jnp.mean(x * x, axis=-1, keepdims=True)
        xn = x * jax.lax.rsqrt(ms + NORM_EPS) * rms_s[l, 0]
        proj = jnp.einsum("bsd,dk->bsk", xn, wall_s[l], precision=hp)
        w0 = proj[..., :H]
        f = jax.nn.sigmoid(proj[..., H:2 * H])
        i = jax.nn.sigmoid(proj[..., 2 * H:3 * H])
        ht = proj[..., 3 * H:]
        denom = 1.0 / (f + i + GATE_EPS)
        a = f * denom
        b = ht * i * denom

        def step(h_prev, ab):
            a_t, b_t = ab
            h_new = a_t * h_prev + b_t
            return h_new, h_new

        _, h = jax.lax.scan(step, jnp.zeros_like(a[:, 0]),
                            (jnp.swapaxes(a, 0, 1), jnp.swapaxes(b, 0, 1)))
        h = jnp.swapaxes(h, 0, 1)                       # (B, S, H)
        h = h * (w0 * jax.nn.sigmoid(w0))
        x = x + jnp.einsum("bsh,hd->bsd", h, wo_s[l], precision=hp)
    return x


if __name__ == "__main__":
    B, S, D = 4, 16, 128
    N_LAYERS = 2
    MULTIPLE_OF = 128              # -> hidden_dim H = 256 (lane-aligned)

    key = jax.random.PRNGKey(0)
    kx, kp = jax.random.split(key)
    x = jax.random.normal(kx, (B, S, D), jnp.float32)
    params = init_params(kp, D, N_LAYERS, MULTIPLE_OF)

    y = base_min_lstm_forward(x, params)
    jax.block_until_ready(y)

    y_ref = _ref_forward(x, params)
    # Kernel uses bf16 matmul operands (f32 acc) and an approx EUP reciprocal;
    # the reference is full f32.
    np.testing.assert_allclose(np.asarray(y), np.asarray(y_ref),
                               rtol=3e-2, atol=3e-2)
    assert y.shape == (B, S, D) and bool(jnp.all(jnp.isfinite(y)))
    print("KERNEL_OK")
</pallas_src>

<mosaic_0001>
module attributes {stable_mosaic.version = 11 : i64} {
  func.func @_minlstm_stack_kernel(%arg0: i32, %arg1: i32, %arg2: memref<32x128xf32, #tpu.memory_space<vmem>>, %arg3: memref<1x1x128xf32, #tpu.memory_space<vmem>>, %arg4: memref<1x128x1024xbf16, #tpu.memory_space<vmem>>, %arg5: memref<1x256x128xbf16, #tpu.memory_space<vmem>>, %arg6: memref<32x128xf32, #tpu.memory_space<vmem>>) attributes {dimension_semantics = [#tpu.dimension_semantics<parallel>, #tpu.dimension_semantics<arbitrary>], iteration_bounds = array<i64: 2, 2>, scalar_prefetch = 0 : i64, scratch_operands = 0 : i64, tpu.core_type = #tpu.core_type<tc>, window_params = [{transform_indices = @transform_0, window_bounds = array<i64: 32, 128>}, {transform_indices = @transform_1, window_bounds = array<i64: 1, 1, 128>}, {transform_indices = @transform_2, window_bounds = array<i64: 1, 128, 1024>}, {transform_indices = @transform_3, window_bounds = array<i64: 1, 256, 128>}, {transform_indices = @transform_4, window_bounds = array<i64: 32, 128>}]} {
    %c0_i32 = arith.constant 0 : i32
    %0 = arith.cmpi eq, %arg1, %c0_i32 : i32
    %1 = arith.extui %0 : i1 to i32
    %c0_i32_0 = arith.constant 0 : i32
    %2 = arith.cmpi ne, %1, %c0_i32_0 : i32
    scf.if %2 {
      %c0_40 = arith.constant 0 : index
      %c0_41 = arith.constant 0 : index
      %113 = vector.load %arg2[%c0_40, %c0_41] : memref<32x128xf32, #tpu.memory_space<vmem>>, vector<32x128xf32>
      %c0_42 = arith.constant 0 : index
      %c0_43 = arith.constant 0 : index
      %114 = vector.load %arg6[%c0_42, %c0_43] : memref<32x128xf32, #tpu.memory_space<vmem>>, vector<32x128xf32>
      tpu.vector_store %arg6[%c0_42, %c0_43], %113 {strides = array<i32>} : memref<32x128xf32, #tpu.memory_space<vmem>>, vector<32x128xf32>,
    } else {
    }
    %c0 = arith.constant 0 : index
    %c0_1 = arith.constant 0 : index
    %3 = vector.load %arg6[%c0, %c0_1] : memref<32x128xf32, #tpu.memory_space<vmem>>, vector<32x128xf32>
    %4 = arith.mulf %3, %3 : vector<32x128xf32>
    %cst = arith.constant dense<0.000000e+00> : vector<32xf32>
    %5 = vector.multi_reduction <add>, %4, %cst [1] : vector<32x128xf32> to vector<32xf32>
    %6 = vector.shape_cast %5 : vector<32xf32> to vector<32x1xf32>
    %cst_2 = arith.constant 1.280000e+02 : f32
    %7 = vector.broadcast %cst_2 : f32 to vector<32x1xf32>
    %8 = arith.divf %6, %7 : vector<32x1xf32>
    %cst_3 = arith.constant 9.99999974E-6 : f32
    %9 = vector.broadcast %cst_3 : f32 to vector<32x1xf32>
    %10 = arith.addf %8, %9 : vector<32x1xf32>
    %11 = math.rsqrt %10 : vector<32x1xf32>
    %12 = vector.broadcast %11 : vector<32x1xf32> to vector<32x128xf32>
    %13 = arith.mulf %3, %12 : vector<32x128xf32>
    %c0_4 = arith.constant 0 : index
    %c0_5 = arith.constant 0 : index
    %c0_6 = arith.constant 0 : index
    %14 = vector.load %arg3[%c0_4, %c0_5, %c0_6] : memref<1x1x128xf32, #tpu.memory_space<vmem>>, vector<1x1x128xf32>
    %15 = vector.shape_cast %14 : vector<1x1x128xf32> to vector<1x128xf32>
    %16 = vector.broadcast %15 : vector<1x128xf32> to vector<32x128xf32>
    %17 = arith.mulf %13, %16 : vector<32x128xf32>
    %18 = arith.truncf %17 : vector<32x128xf32> to vector<32x128xbf16>
    %c0_7 = arith.constant 0 : index
    %c0_8 = arith.constant 0 : index
    %c0_9 = arith.constant 0 : index
    %19 = vector.load %arg4[%c0_7, %c0_8, %c0_9] : memref<1x128x1024xbf16, #tpu.memory_space<vmem>>, vector<1x128x1024xbf16>
    %20 = vector.shape_cast %19 : vector<1x128x1024xbf16> to vector<128x1024xbf16>
    %cst_10 = arith.constant dense<0.000000e+00> : vector<32x1024xf32>
    %21 = tpu.matmul %18, %20, %cst_10 {dimension_numbers = #tpu.dot_dimension_numbers<[1], [0], [0], [1], [0, 0, 1, 1], [], []>} : vector<32x128xbf16>, vector<128x1024xbf16>, vector<32x1024xf32> -> vector<32x1024xf32>
    %22 = vector.extract_strided_slice %21 {offsets = [0, 0], sizes = [32, 256], strides = [1, 1]} : vector<32x1024xf32> to vector<32x256xf32>
    %23 = vector.extract_strided_slice %21 {offsets = [0, 256], sizes = [32, 256], strides = [1, 1]} : vector<32x1024xf32> to vector<32x256xf32>
    %24 = arith.negf %23 : vector<32x256xf32>
    %25 = math.exp %24 : vector<32x256xf32>
    %cst_11 = arith.constant 1.000000e+00 : f32
    %26 = vector.broadcast %cst_11 : f32 to vector<32x256xf32>
    %27 = arith.addf %26, %25 : vector<32x256xf32>
    %28 = arith.divf %26, %27 : vector<32x256xf32>
    %29 = vector.extract_strided_slice %21 {offsets = [0, 512], sizes = [32, 256], strides = [1, 1]} : vector<32x1024xf32> to vector<32x256xf32>
    %30 = arith.negf %29 : vector<32x256xf32>
    %31 = math.exp %30 : vector<32x256xf32>
    %cst_12 = arith.constant 1.000000e+00 : f32
    %32 = vector.broadcast %cst_12 : f32 to vector<32x256xf32>
    %33 = arith.addf %32, %31 : vector<32x256xf32>
    %34 = arith.divf %32, %33 : vector<32x256xf32>
    %35 = vector.extract_strided_slice %21 {offsets = [0, 768], sizes = [32, 256], strides = [1, 1]} : vector<32x1024xf32> to vector<32x256xf32>
    %36 = arith.addf %28, %34 : vector<32x256xf32>
    %cst_13 = arith.constant 9.99999974E-5 : f32
    %37 = vector.broadcast %cst_13 : f32 to vector<32x256xf32>
    %38 = arith.addf %36, %37 : vector<32x256xf32>
    %39 = tpu.reciprocal %38 {approx = true} : vector<32x256xf32> -> vector<32x256xf32>
    %40 = arith.mulf %28, %39 : vector<32x256xf32>
    %41 = arith.mulf %35, %34 : vector<32x256xf32>
    %42 = arith.mulf %41, %39 : vector<32x256xf32>
    %43 = tpu.iota {dimensions = array<i32: 0>} : vector<32x256xi32>
    %c16_i32 = arith.constant 16 : i32
    %c0_i32_14 = arith.constant 0 : i32
    %44 = arith.cmpi eq, %c16_i32, %c0_i32_14 : i32
    %c1_i32 = arith.constant 1 : i32
    %45 = arith.select %44, %c1_i32, %c16_i32 : i32
    %46 = vector.broadcast %45 : i32 to vector<32x256xi32>
    %47 = arith.remsi %43, %46 : vector<32x256xi32>
    %c0_i32_15 = arith.constant 0 : i32
    %48 = vector.broadcast %c0_i32_15 : i32 to vector<32x256xi32>
    %49 = arith.cmpi ne, %47, %48 : vector<32x256xi32>
    %c0_i32_16 = arith.constant 0 : i32
    %50 = vector.broadcast %c0_i32_16 : i32 to vector<32x256xi32>
    %51 = arith.cmpi slt, %47, %50 : vector<32x256xi32>
    %c0_i32_17 = arith.constant 0 : i32
    %52 = arith.cmpi slt, %45, %c0_i32_17 : i32
    %53 = vector.broadcast %52 : i1 to vector<32x256xi1>
    %54 = vector.broadcast %53 : vector<32x256xi1> to vector<32x256xi1>
    %55 = arith.xori %51, %54 : vector<32x256xi1>
    %56 = arith.andi %55, %49 : vector<32x256xi1>
    %57 = vector.broadcast %45 : i32 to vector<32x256xi32>
    %58 = arith.addi %47, %57 : vector<32x256xi32>
    %59 = arith.select %56, %58, %47 : vector<32x256xi1>, vector<32x256xi32>
    %c1_i32_18 = arith.constant 1 : i32
    %60 = vector.broadcast %c1_i32_18 : i32 to vector<32x256xi32>
    %61 = arith.cmpi sge, %59, %60 : vector<32x256xi32>
    %c1_i32_19 = arith.constant 1 : i32
    %62 = tpu.dynamic_rotate %40 by %c1_i32_19 dim 0 : vector<32x256xf32>, i32 -> vector<32x256xf32>
    %cst_20 = arith.constant 1.000000e+00 : f32
    %63 = vector.broadcast %cst_20 : f32 to vector<32x256xf32>
    %64 = arith.select %61, %62, %63 : vector<32x256xi1>, vector<32x256xf32>
    %c1_i32_21 = arith.constant 1 : i32
    %65 = tpu.dynamic_rotate %42 by %c1_i32_21 dim 0 : vector<32x256xf32>, i32 -> vector<32x256xf32>
    %cst_22 = arith.constant 0.000000e+00 : f32
    %66 = vector.broadcast %cst_22 : f32 to vector<32x256xf32>
    %67 = arith.select %61, %65, %66 : vector<32x256xi1>, vector<32x256xf32>
    %68 = arith.mulf %40, %67 : vector<32x256xf32>
    %69 = arith.addf %68, %42 : vector<32x256xf32>
    %70 = arith.mulf %40, %64 : vector<32x256xf32>
    %c2_i32 = arith.constant 2 : i32
    %71 = vector.broadcast %c2_i32 : i32 to vector<32x256xi32>
    %72 = arith.cmpi sge, %59, %71 : vector<32x256xi32>
    %c2_i32_23 = arith.constant 2 : i32
    %73 = tpu.dynamic_rotate %70 by %c2_i32_23 dim 0 : vector<32x256xf32>, i32 -> vector<32x256xf32>
    %cst_24 = arith.constant 1.000000e+00 : f32
    %74 = vector.broadcast %cst_24 : f32 to vector<32x256xf32>
    %75 = arith.select %72, %73, %74 : vector<32x256xi1>, vector<32x256xf32>
    %c2_i32_25 = arith.constant 2 : i32
    %76 = tpu.dynamic_rotate %69 by %c2_i32_25 dim 0 : vector<32x256xf32>, i32 -> vector<32x256xf32>
    %cst_26 = arith.constant 0.000000e+00 : f32
    %77 = vector.broadcast %cst_26 : f32 to vector<32x256xf32>
    %78 = arith.select %72, %76, %77 : vector<32x256xi1>, vector<32x256xf32>
    %79 = arith.mulf %70, %78 : vector<32x256xf32>
    %80 = arith.addf %79, %69 : vector<32x256xf32>
    %81 = arith.mulf %70, %75 : vector<32x256xf32>
    %c4_i32 = arith.constant 4 : i32
    %82 = vector.broadcast %c4_i32 : i32 to vector<32x256xi32>
    %83 = arith.cmpi sge, %59, %82 : vector<32x256xi32>
    %c4_i32_27 = arith.constant 4 : i32
    %84 = tpu.dynamic_rotate %81 by %c4_i32_27 dim 0 : vector<32x256xf32>, i32 -> vector<32x256xf32>
    %cst_28 = arith.constant 1.000000e+00 : f32
    %85 = vector.broadcast %cst_28 : f32 to vector<32x256xf32>
    %86 = arith.select %83, %84, %85 : vector<32x256xi1>, vector<32x256xf32>
    %c4_i32_29 = arith.constant 4 : i32
    %87 = tpu.dynamic_rotate %80 by %c4_i32_29 dim 0 : vector<32x256xf32>, i32 -> vector<32x256xf32>
    %cst_30 = arith.constant 0.000000e+00 : f32
    %88 = vector.broadcast %cst_30 : f32 to vector<32x256xf32>
    %89 = arith.select %83, %87, %88 : vector<32x256xi1>, vector<32x256xf32>
    %90 = arith.mulf %81, %89 : vector<32x256xf32>
    %91 = arith.addf %90, %80 : vector<32x256xf32>
    %92 = arith.mulf %81, %86 : vector<32x256xf32>
    %c8_i32 = arith.constant 8 : i32
    %93 = vector.broadcast %c8_i32 : i32 to vector<32x256xi32>
    %94 = arith.cmpi sge, %59, %93 : vector<32x256xi32>
    %c8_i32_31 = arith.constant 8 : i32
    %95 = tpu.dynamic_rotate %91 by %c8_i32_31 dim 0 : vector<32x256xf32>, i32 -> vector<32x256xf32>
    %cst_32 = arith.constant 0.000000e+00 : f32
    %96 = vector.broadcast %cst_32 : f32 to vector<32x256xf32>
    %97 = arith.select %94, %95, %96 : vector<32x256xi1>, vector<32x256xf32>
    %98 = arith.mulf %92, %97 : vector<32x256xf32>
    %99 = arith.addf %98, %91 : vector<32x256xf32>
    %100 = arith.negf %22 : vector<32x256xf32>
    %101 = math.exp %100 : vector<32x256xf32>
    %cst_33 = arith.constant 1.000000e+00 : f32
    %102 = vector.broadcast %cst_33 : f32 to vector<32x256xf32>
    %103 = arith.addf %102, %101 : vector<32x256xf32>
    %104 = arith.divf %102, %103 : vector<32x256xf32>
    %105 = arith.mulf %22, %104 : vector<32x256xf32>
    %106 = arith.mulf %99, %105 : vector<32x256xf32>
    %107 = arith.truncf %106 : vector<32x256xf32> to vector<32x256xbf16>
    %c0_34 = arith.constant 0 : index
    %c0_35 = arith.constant 0 : index
    %c0_36 = arith.constant 0 : index
    %108 = vector.load %arg5[%c0_34, %c0_35, %c0_36] : memref<1x256x128xbf16, #tpu.memory_space<vmem>>, vector<1x256x128xbf16>
    %109 = vector.shape_cast %108 : vector<1x256x128xbf16> to vector<256x128xbf16>
    %cst_37 = arith.constant dense<0.000000e+00> : vector<32x128xf32>
    %110 = tpu.matmul %107, %109, %cst_37 {dimension_numbers = #tpu.dot_dimension_numbers<[1], [0], [0], [1], [0, 0, 1, 1], [], []>} : vector<32x256xbf16>, vector<256x128xbf16>, vector<32x128xf32> -> vector<32x128xf32>
    %111 = arith.addf %3, %110 : vector<32x128xf32>
    %c0_38 = arith.constant 0 : index
    %c0_39 = arith.constant 0 : index
    %112 = vector.load %arg6[%c0_38, %c0_39] : memref<32x128xf32, #tpu.memory_space<vmem>>, vector<32x128xf32>
    tpu.vector_store %arg6[%c0_38, %c0_39], %111 {strides = array<i32>} : memref<32x128xf32, #tpu.memory_space<vmem>>, vector<32x128xf32>,
    return
  }
  func.func @transform_0(%arg0: i32, %arg1: i32) -> (i32, i32) {
    %c0_i32 = arith.constant 0 : i32
    %c0_i32_0 = arith.constant 0 : i32
    return %arg0, %c0_i32 : i32, i32
  }
  func.func @transform_1(%arg0: i32, %arg1: i32) -> (i32, i32, i32) {
    %c0_i32 = arith.constant 0 : i32
    %c0_i32_0 = arith.constant 0 : i32
    %c0_i32_1 = arith.constant 0 : i32
    return %arg1, %c0_i32, %c0_i32_0 : i32, i32, i32
  }
  func.func @transform_2(%arg0: i32, %arg1: i32) -> (i32, i32, i32) {
    %c0_i32 = arith.constant 0 : i32
    %c0_i32_0 = arith.constant 0 : i32
    %c0_i32_1 = arith.constant 0 : i32
    return %arg1, %c0_i32, %c0_i32_0 : i32, i32, i32
  }
  func.func @transform_3(%arg0: i32, %arg1: i32) -> (i32, i32, i32) {
    %c0_i32 = arith.constant 0 : i32
    %c0_i32_0 = arith.constant 0 : i32
    %c0_i32_1 = arith.constant 0 : i32
    return %arg1, %c0_i32, %c0_i32_0 : i32, i32, i32
  }
  func.func @transform_4(%arg0: i32, %arg1: i32) -> (i32, i32) {
    %c0_i32 = arith.constant 0 : i32
    %c0_i32_0 = arith.constant 0 : i32
    return %arg0, %c0_i32 : i32, i32
  }
}

</mosaic_0001>

<llo_original>
// kernel: base_min_lstm_forward.1
$region0: #{base_min_lstm_forward.1}
  #allocation0 [shape = 'u32[]', space=smem, size = 0x4, offset = 0x4, fixed_abs, tag = 'smem constant byte address 0x4 - core index']
  #allocation1 [shape = 'u32[144,128]{1,0:T(1,128)}', space=vmem, size = 0x12000, scoped, tag = 'internal scratch']
  %s0 = inlined_call_operand.vmem [shape: f32[64,128], index: 0, kind: input, shape index: {}, may-alias: {0,4}]
  %s1 = inlined_call_operand.vmem [shape: f32[2,1,128], index: 1, kind: input, shape index: {}]
  %s2 = inlined_call_operand.hbm [shape: bf16[2,128,1024], index: 2, kind: input, shape index: {}]
  %s3 = inlined_call_operand.hbm [shape: bf16[2,256,128], index: 3, kind: input, shape index: {}]
  %s4 = inlined_call_operand.vmem [shape: f32[64,128], index: 4, kind: output, shape index: {}, may-alias: {0,4}]
  %s5 = sld [smem:[#allocation0]]
  $region61: #{base_min_lstm_forward.1} parent=0
    _
  %s7 = ssub.s32 1, %s5
  %s8 = scalar_select 0, %s7, %s5
  $region1: #{base_min_lstm_forward.1} parent=0
    #allocation2 [shape = 'u8[524288]{0}', space=vmem, size = 0x80000, scoped, tag = 'input window, operand 2']
    #allocation3 [shape = 's32[2]{0}', space=sflag, size = 0x8, scoped, tag = 'scoped memory for base_min_lstm_forward.1']
    #allocation4 [shape = 'u8[131072]{0}', space=vmem, size = 0x20000, scoped, tag = 'input window, operand 3']
    #allocation5 [shape = 's32[2]{0}', space=sflag, size = 0x8, scoped, tag = 'scoped memory for base_min_lstm_forward.1']
    %9 = vsyncpa [#allocation3], 0
    %s10 = scalar_lea.sflag [#allocation3], 1
    %11 = vsyncpa %s10, 0
    %12 = vsyncpa [#allocation5], 0
    %s13 = scalar_lea.sflag [#allocation5], 1
    %14 = vsyncpa %s13, 0
    loop: start=0, step=1, limit=6
    $region2: #{base_min_lstm_forward.1} parent=1 // loop_pre_header
      _
    $region3: #{base_min_lstm_forward.1} parent=1 // loop_header
      %s16 = sphi 0, %s20
      %p17 = scmp.ge.s32.totalorder %s16, 6
      %s23 = sphi 0, %s35
      %s24 = sphi 0, %s31
      %s25 = sphi 0, %s23
      %s26 = sphi 0, %s24
      %s27 = sphi 0, %s25
      %s28 = sphi 0, %s26
      %s38 = sphi 0, %s40
      %s41 = sphi 0, %s38
      %s42 = sphi 0, %s41
      %s58 = sphi 0, %s42
      %s64 = sphi 0, %s66
      %s67 = sphi 0, %s64
      %s68 = sphi 0, %s67
      %s84 = sphi 0, %s68
      %s90 = sphi 0, %s92
      %s93 = sphi 0, %s90
      %s94 = sphi 0, %s93
      %s110 = sphi 0, %s94
      %s116 = sphi 0, %s118
      %s119 = sphi 0, %s116
      %s120 = sphi 0, %s119
      %s136 = sphi 0, %s120
      %s142 = sphi 0, %s144
      %s145 = sphi 0, %s142
      %s146 = sphi 0, %s145
      %s162 = sphi 0, %s146
    $region4: #{base_min_lstm_forward.1} parent=1 // loop_header_branch
      %19 = sbr.rel (%p17) target = $region8
    $region5: #{base_min_lstm_forward.1} parent=1 // loop_body
      %s21 = ssub.s32 %s16, 1
      %s22 = ssub.s32 %s16, 2
      %s29 = sadd.s32 1, %s24
      %p30 = scmp.ge.s32.totalorder %s29, 2
      %s31 = scalar_select %p30, 0, %s29
      %s32 = sadd.s32 1, %s23
      %s33 = scalar_select %p30, %s32, %s23
      %p34 = scmp.ge.s32.totalorder %s33, 2
      %s35 = scalar_select %p34, 0, %s33
      %s36 = ssub.s32 %s23, %s35
      %p37 = scmp.eq.s32.totalorder %s36, 0
      %s39 = sadd.s32 %s38, 1
      %s40 = scalar_select %p37, %s38, %s39
      %p43 = pneg %p37
      %p44 = scmp.eq.s32.totalorder %s16, 3
      %p45 = por %p43, %p44
      %p46 = scmp.ne.s32.totalorder %s38, %s41
      %p47 = scmp.eq.s32.totalorder %s16, 0
      %p48 = por %p46, %p47
      %p49 = scmp.ne.s32.totalorder %s38, %s41
      %p50 = scmp.eq.s32.totalorder %s21, 3
      %p51 = por %p49, %p50
      %p52 = scmp.ne.s32.totalorder %s41, %s42
      %p53 = scmp.eq.s32.totalorder %s21, 0
      %p54 = por %p52, %p53
      %p55 = scmp.ne.s32.totalorder %s41, %s42
      %p56 = scmp.eq.s32.totalorder %s22, 3
      %p57 = por %p55, %p56
      %p59 = scmp.ne.s32.totalorder %s42, %s58
      %p60 = scmp.eq.s32.totalorder %s22, 0
      %p61 = por %p59, %p60
      %s62 = ssub.s32 %s24, %s31
      %p63 = scmp.eq.s32.totalorder %s62, 0
      %s65 = sadd.s32 %s64, 1
      %s66 = scalar_select %p63, %s64, %s65
      %p69 = pneg %p63
      %p70 = scmp.eq.s32.totalorder %s16, 3
      %p71 = por %p69, %p70
      %p72 = scmp.ne.s32.totalorder %s64, %s67
      %p73 = scmp.eq.s32.totalorder %s16, 0
      %p74 = por %p72, %p73
      %p75 = scmp.ne.s32.totalorder %s64, %s67
      %p76 = scmp.eq.s32.totalorder %s21, 3
      %p77 = por %p75, %p76
      %p78 = scmp.ne.s32.totalorder %s67, %s68
      %p79 = scmp.eq.s32.totalorder %s21, 0
      %p80 = por %p78, %p79
      %p81 = scmp.ne.s32.totalorder %s67, %s68
      %p82 = scmp.eq.s32.totalorder %s22, 3
      %p83 = por %p81, %p82
      %p85 = scmp.ne.s32.totalorder %s68, %s84
      %p86 = scmp.eq.s32.totalorder %s22, 0
      %p87 = por %p85, %p86
      %s88 = ssub.s32 %s24, %s31
      %p89 = scmp.eq.s32.totalorder %s88, 0
      %s91 = sadd.s32 %s90, 1
      %s92 = scalar_select %p89, %s90, %s91
      %p95 = pneg %p89
      %p96 = scmp.eq.s32.totalorder %s16, 3
      %p97 = por %p95, %p96
      %p98 = scmp.ne.s32.totalorder %s90, %s93
      %p99 = scmp.eq.s32.totalorder %s16, 0
      %p100 = por %p98, %p99
      %p101 = scmp.ne.s32.totalorder %s90, %s93
      %p102 = scmp.eq.s32.totalorder %s21, 3
      %p103 = por %p101, %p102
      %p104 = scmp.ne.s32.totalorder %s93, %s94
      %p105 = scmp.eq.s32.totalorder %s21, 0
      %p106 = por %p104, %p105
      %p107 = scmp.ne.s32.totalorder %s93, %s94
      %p108 = scmp.eq.s32.totalorder %s22, 3
      %p109 = por %p107, %p108
      %p111 = scmp.ne.s32.totalorder %s94, %s110
      %p112 = scmp.eq.s32.totalorder %s22, 0
      %p113 = por %p111, %p112
      %s114 = ssub.s32 %s24, %s31
      %p115 = scmp.eq.s32.totalorder %s114, 0
      %s117 = sadd.s32 %s116, 1
      %s118 = scalar_select %p115, %s116, %s117
      %p121 = pneg %p115
      %p122 = scmp.eq.s32.totalorder %s16, 3
      %p123 = por %p121, %p122
      %p124 = scmp.ne.s32.totalorder %s116, %s119
      %p125 = scmp.eq.s32.totalorder %s16, 0
      %p126 = por %p124, %p125
      %p127 = scmp.ne.s32.totalorder %s116, %s119
      %p128 = scmp.eq.s32.totalorder %s21, 3
      %p129 = por %p127, %p128
      %p130 = scmp.ne.s32.totalorder %s119, %s120
      %p131 = scmp.eq.s32.totalorder %s21, 0
      %p132 = por %p130, %p131
      %p133 = scmp.ne.s32.totalorder %s119, %s120
      %p134 = scmp.eq.s32.totalorder %s22, 3
      %p135 = por %p133, %p134
      %p137 = scmp.ne.s32.totalorder %s120, %s136
      %p138 = scmp.eq.s32.totalorder %s22, 0
      %p139 = por %p137, %p138
      %s140 = ssub.s32 %s23, %s35
      %p141 = scmp.eq.s32.totalorder %s140, 0
      %s143 = sadd.s32 %s142, 1
      %s144 = scalar_select %p141, %s142, %s143
      %p147 = pneg %p141
      %p148 = scmp.eq.s32.totalorder %s16, 3
      %p149 = por %p147, %p148
      %p150 = scmp.ne.s32.totalorder %s142, %s145
      %p151 = scmp.eq.s32.totalorder %s16, 0
      %p152 = por %p150, %p151
      %p153 = scmp.ne.s32.totalorder %s142, %s145
      %p154 = scmp.eq.s32.totalorder %s21, 3
      %p155 = por %p153, %p154
      %p156 = scmp.ne.s32.totalorder %s145, %s146
      %p157 = scmp.eq.s32.totalorder %s21, 0
      %p158 = por %p156, %p157
      %p159 = scmp.ne.s32.totalorder %s145, %s146
      %p160 = scmp.eq.s32.totalorder %s22, 3
      %p161 = por %p159, %p160
      %p163 = scmp.ne.s32.totalorder %s146, %s162
      %p164 = scmp.eq.s32.totalorder %s22, 0
      %p165 = por %p163, %p164
      %p166 = scmp.le.s32.totalorder 1, %s16
      %p167 = scmp.lt.s32.totalorder %s16, 5
      %p168 = pnand %p166, %p167
      %p169 = pneg %p168
      // Predicated region
      $region9: #{base_min_lstm_forward.1} parent=5 // pred_check
        _
      $region10: #{base_min_lstm_forward.1} parent=5 // pred_check_branch
        %171 = sbr.rel (%p168) target = $region12
      $region11: #{base_min_lstm_forward.1} parent=5 // pred_region
        %s172 = ssub.s32 %s16, 1
      $region12: #{base_min_lstm_forward.1} parent=5 // pred_fallthru
        _
      %p173 = scmp.lt.s32.totalorder %s16, 4
      // Predicated region
      $region13: #{base_min_lstm_forward.1} parent=5 // pred_check
        %p174 = pneg %p173
      $region14: #{base_min_lstm_forward.1} parent=5 // pred_check_branch
        %176 = sbr.rel (%p174) target = $region16
      $region15: #{base_min_lstm_forward.1} parent=5 // pred_region
        // Predicated region
        $region17: #{base_min_lstm_forward.1} parent=15 // pred_check
          %p177 = pneg %p48
        $region18: #{base_min_lstm_forward.1} parent=15 // pred_check_branch
          %179 = sbr.rel (%p177) target = $region20
        $region19: #{base_min_lstm_forward.1} parent=15 // pred_region
          %s180 = smul.u32 4, %s23
          %p181 = scmp.lt.s32.totalorder %s180, 7
          %s182 = scalar_select %p181, %s180, 7
          %s183 = smul.addr %s182, 8
          %s184 = scalar_lea.vmem %s0, %s183
          %s185 = smul.u32 4, %s23
        $region20: #{base_min_lstm_forward.1} parent=15 // pred_fallthru
          _
        // Predicated region
        $region21: #{base_min_lstm_forward.1} parent=15 // pred_check
          %p186 = pneg %p74
        $region22: #{base_min_lstm_forward.1} parent=15 // pred_check_branch
          %188 = sbr.rel (%p186) target = $region24
        $region23: #{base_min_lstm_forward.1} parent=15 // pred_region
          %p189 = scmp.lt.s32.totalorder %s24, 1
          %s190 = scalar_select %p189, %s24, 1
          %s191 = scalar_lea.vmem %s1, %s190
        $region24: #{base_min_lstm_forward.1} parent=15 // pred_fallthru
          _
        // Predicated region
        $region25: #{base_min_lstm_forward.1} parent=15 // pred_check
          %p192 = pneg %p100
        $region26: #{base_min_lstm_forward.1} parent=15 // pred_check_branch
          %194 = sbr.rel (%p192) target = $region28
        $region27: #{base_min_lstm_forward.1} parent=15 // pred_region
          %s195 = sand.u32 %s90, 1
          %s196 = scalar_lea.sflag [#allocation3], %s195
          %s197 = sand.u32 %s90, 1
          %s198 = smul.addr %s197, 512
          %s199 = scalar_lea.vmem [#allocation2], %s198
          %s201 = ssub.s32 8192, 8192
          %202 = vsyncadd %s196, %s201
          %s203 = smul.addr %s24, 128
          %s204 = smul.addr %s203, 64
          %s205 = scalar_lea.hbm %s2, %s204
          %s206 = sshll.u32 %s199, 4
          %s207 = int_to_ptr.vmem [resolvable:$true] %s206
          %212 = dma.hbm_to_vmem [thread:$0]  %s205, 8192, %s207, %s196, 512, 512, 32
        $region28: #{base_min_lstm_forward.1} parent=15 // pred_fallthru
          _
        // Predicated region
        $region29: #{base_min_lstm_forward.1} parent=15 // pred_check
          %p213 = pneg %p126
        $region30: #{base_min_lstm_forward.1} parent=15 // pred_check_branch
          %215 = sbr.rel (%p213) target = $region32
        $region31: #{base_min_lstm_forward.1} parent=15 // pred_region
          %s216 = sand.u32 %s116, 1
          %s217 = scalar_lea.sflag [#allocation5], %s216
          %s218 = sand.u32 %s116, 1
          %s219 = smul.addr %s218, 128
          %s220 = scalar_lea.vmem [#allocation4], %s219
          %s222 = ssub.s32 2048, 2048
          %223 = vsyncadd %s217, %s222
          %s224 = smul.addr %s24, 32
          %s225 = smul.addr %s224, 64
          %s226 = scalar_lea.hbm %s3, %s225
          %s227 = sshll.u32 %s220, 4
          %s228 = int_to_ptr.vmem [resolvable:$true] %s227
          %233 = dma.hbm_to_vmem [thread:$0]  %s226, 2048, %s228, %s217, 64, 64, 4
        $region32: #{base_min_lstm_forward.1} parent=15 // pred_fallthru
          _
      $region16: #{base_min_lstm_forward.1} parent=5 // pred_fallthru
        _
      %p234 = scmp.le.s32.totalorder 1, %s16
      %p235 = scmp.lt.s32.totalorder %s16, 5
      %p236 = pnand %p234, %p235
      %p237 = pneg %p236
      // Predicated region
      $region33: #{base_min_lstm_forward.1} parent=5 // pred_check
        _
      $region34: #{base_min_lstm_forward.1} parent=5 // pred_check_branch
        %239 = sbr.rel (%p236) target = $region36
      $region35: #{base_min_lstm_forward.1} parent=5 // pred_region
        %s240 = ssub.s32 %s16, 1
        %s241 = sand.u32 %s93, 1
        %s242 = scalar_lea.sflag [#allocation3], %s241
        %s243 = sand.u32 %s93, 1
        %s244 = smul.addr %s243, 512
        %s245 = scalar_lea.vmem [#allocation2], %s244
        // Predicated region
        $region37: #{base_min_lstm_forward.1} parent=35 // pred_check
          %p246 = pneg %p106
        $region38: #{base_min_lstm_forward.1} parent=35 // pred_check_branch
          %248 = sbr.rel (%p246) target = $region40
        $region39: #{base_min_lstm_forward.1} parent=35 // pred_region
          %249 = dma.done %s242, 8192
        $region40: #{base_min_lstm_forward.1} parent=35 // pred_fallthru
          _
        %s250 = sand.u32 %s119, 1
        %s251 = scalar_lea.sflag [#allocation5], %s250
        %s252 = sand.u32 %s119, 1
        %s253 = smul.addr %s252, 128
        %s254 = scalar_lea.vmem [#allocation4], %s253
        // Predicated region
        $region41: #{base_min_lstm_forward.1} parent=35 // pred_check
          %p255 = pneg %p132
        $region42: #{base_min_lstm_forward.1} parent=35 // pred_check_branch
          %257 = sbr.rel (%p255) target = $region44
        $region43: #{base_min_lstm_forward.1} parent=35 // pred_region
          %258 = dma.done %s251, 2048
        $region44: #{base_min_lstm_forward.1} parent=35 // pred_fallthru
          _
        %s259 = smul.u32 4, %s25
        %p260 = scmp.lt.s32.totalorder %s259, 7
        %s261 = scalar_select %p260, %s259, 7
        %s262 = smul.addr %s261, 8
        %s263 = scalar_lea.vmem %s0, %s262
        %p264 = pneg %p54
        %p265 = pneg %p51
        %p266 = scmp.lt.s32.totalorder %s26, 1
        %s267 = scalar_select %p266, %s26, 1
        %s268 = scalar_lea.vmem %s1, %s267
        %p269 = pneg %p80
        %p270 = pneg %p77
        %s271 = sand.u32 %s93, 1
        %s272 = scalar_lea.sflag [#allocation3], %s271
        %s273 = sand.u32 %s93, 1
        %s274 = smul.addr %s273, 512
        %s275 = scalar_lea.vmem [#allocation2], %s274
        %p276 = pneg %p106
        %p277 = pneg %p103
        %s278 = sand.u32 %s119, 1
        %s279 = scalar_lea.sflag [#allocation5], %s278
        %s280 = sand.u32 %s119, 1
        %s281 = smul.addr %s280, 128
        %s282 = scalar_lea.vmem [#allocation4], %s281
        %p283 = pneg %p132
        %p284 = pneg %p129
        %p285 = pneg %p158
        %p286 = pneg %p155
        %s287 = smul.u32 4, %s25
        %p288 = scmp.lt.s32.totalorder %s287, 7
        %s289 = scalar_select %p288, %s287, 7
        %s290 = smul.addr %s289, 8
        %s291 = scalar_lea.vmem %s4, %s290
        %s292 = smul.u32 4, %s25
        %p293 = scmp.lt.s32.totalorder %s292, 7
        %s294 = scalar_select %p293, %s292, 7
        %s295 = smul.addr %s294, 8
        %s296 = scalar_lea.vmem %s0, %s295
        %s297 = smul.u32 4, %s25
        %p298 = scmp.lt.s32.totalorder %s26, 1
        %s299 = scalar_select %p298, %s26, 1
        %s300 = scalar_lea.vmem %s1, %s299
        %s301 = smul.u32 4, %s25
        %p302 = scmp.lt.s32.totalorder %s301, 7
        %s303 = scalar_select %p302, %s301, 7
        %s304 = smul.addr %s303, 8
        %s305 = scalar_lea.vmem %s4, %s304
        %s306 = smul.u32 4, %s25
        %p308 = scmp.eq.s32.totalorder %s26, 0
        // Predicated region
        $region45: #{base_min_lstm_forward.1} parent=35 // pred_check
          %p309 = pneg %p308
        $region46: #{base_min_lstm_forward.1} parent=35 // pred_check_branch
          %311 = sbr.rel (%p309) target = $region48
        $region47: #{base_min_lstm_forward.1} parent=35 // pred_region
          %v312 = vld [vmem:[%s296] sm:$0xff]
          %v313 = vld [vmem:[%s296 + $0x8] sm:$0xff]
          %v314 = vld [vmem:[%s296 + $0x10] sm:$0xff]
          %v315 = vld [vmem:[%s296 + $0x18] sm:$0xff]
          %316 = vst [vmem:[%s305] sm:$0xff] %v312
          %317 = vst [vmem:[%s305 + $0x8] sm:$0xff] %v313
          %318 = vst [vmem:[%s305 + $0x10] sm:$0xff] %v314
          %319 = vst [vmem:[%s305 + $0x18] sm:$0xff] %v315
        $region48: #{base_min_lstm_forward.1} parent=35 // pred_fallthru
          _
        %v320 = vld [vmem:[%s305] sm:$0xff]
        %v321 = vld [vmem:[%s305 + $0x8] sm:$0xff]
        %v322 = vld [vmem:[%s305 + $0x10] sm:$0xff]
        %v323 = vld [vmem:[%s305 + $0x18] sm:$0xff]
        %v324 = vmul.f32 %v320, %v320
        %v325 = vmul.f32 %v321, %v321
        %v326 = vmul.f32 %v322, %v322
        %v327 = vmul.f32 %v323, %v323
        %328 = vadd.xlane.f32.xlu0 %v324
        %v329 = vpop.xlane.xlu0 %328
        %330 = vadd.xlane.f32.xlu0 %v325
        %v331 = vpop.xlane.xlu0 %330
        %332 = vadd.xlane.f32.xlu0 %v326
        %v333 = vpop.xlane.xlu0 %332
        %334 = vadd.xlane.f32.xlu0 %v327
        %v335 = vpop.xlane.xlu0 %334
        %v336 = vrcp.pop 128.0
        %v337 = vmul.f32 %v329, %v336
        %v338 = vmul.f32 %v331, %v336
        %v339 = vmul.f32 %v333, %v336
        %v340 = vmul.f32 %v335, %v336
        %v341 = vadd.f32 %v337, 1e-05
        %v342 = vadd.f32 %v338, 1e-05
        %v343 = vadd.f32 %v339, 1e-05
        %v344 = vadd.f32 %v340, 1e-05
        %v345 = vrsqrt.pop %v341
        %v346 = vrsqrt.pop %v342
        %v347 = vrsqrt.pop %v343
        %v348 = vrsqrt.pop %v344
        %v349 = vmul.f32 %v320, %v345
        %v350 = vmul.f32 %v321, %v346
        %v351 = vmul.f32 %v322, %v347
        %v352 = vmul.f32 %v323, %v348
        %v353 = vld [vmem:[%s300] sm:$0x1]
        %v355 = vlaneseq
        %v356 = vshrl.u32 %v355, 7
        %v357 = vsub.s32 0, %v356
        %v358 = vrot.slane %v353, %v357
        %v360 = vmul.f32 %v349, %v358
        %v361 = vmul.f32 %v350, %v358
        %v362 = vmul.f32 %v351, %v358
        %v363 = vmul.f32 %v352, %v358
        %v364 = vpack.c.bf16 %v361, %v360
        %v365 = vpack.c.bf16 %v363, %v362
        %v366 = vld [vmem:[%s245] sm:$0xff]
        %v367 = vld [vmem:[%s245 + $0x8] sm:$0xff]
        %v368 = vld [vmem:[%s245 + $0x10] sm:$0xff]
        %v369 = vld [vmem:[%s245 + $0x18] sm:$0xff]
        %v370 = vld [vmem:[%s245 + $0x20] sm:$0xff]
        %v371 = vld [vmem:[%s245 + $0x28] sm:$0xff]
        %v372 = vld [vmem:[%s245 + $0x30] sm:$0xff]
        %v373 = vld [vmem:[%s245 + $0x38] sm:$0xff]
        %v374 = vld [vmem:[%s245 + $0x40] sm:$0xff]
        %v375 = vld [vmem:[%s245 + $0x48] sm:$0xff]
        %v376 = vld [vmem:[%s245 + $0x50] sm:$0xff]
        %v377 = vld [vmem:[%s245 + $0x58] sm:$0xff]
        %v378 = vld [vmem:[%s245 + $0x60] sm:$0xff]
        %v379 = vld [vmem:[%s245 + $0x68] sm:$0xff]
        %v380 = vld [vmem:[%s245 + $0x70] sm:$0xff]
        %v381 = vld [vmem:[%s245 + $0x78] sm:$0xff]
        %v382 = vld [vmem:[%s245 + $0x80] sm:$0xff]
        %v383 = vld [vmem:[%s245 + $0x88] sm:$0xff]
        %v384 = vld [vmem:[%s245 + $0x90] sm:$0xff]
        %v385 = vld [vmem:[%s245 + $0x98] sm:$0xff]
        %v386 = vld [vmem:[%s245 + $0xa0] sm:$0xff]
        %v387 = vld [vmem:[%s245 + $0xa8] sm:$0xff]
        %v388 = vld [vmem:[%s245 + $0xb0] sm:$0xff]
        %v389 = vld [vmem:[%s245 + $0xb8] sm:$0xff]
        %v390 = vld [vmem:[%s245 + $0xc0] sm:$0xff]
        %v391 = vld [vmem:[%s245 + $0xc8] sm:$0xff]
        %v392 = vld [vmem:[%s245 + $0xd0] sm:$0xff]
        %v393 = vld [vmem:[%s245 + $0xd8] sm:$0xff]
        %v394 = vld [vmem:[%s245 + $0xe0] sm:$0xff]
        %v395 = vld [vmem:[%s245 + $0xe8] sm:$0xff]
        %v396 = vld [vmem:[%s245 + $0xf0] sm:$0xff]
        %v397 = vld [vmem:[%s245 + $0xf8] sm:$0xff]
        %v398 = vld [vmem:[%s245 + $0x100] sm:$0xff]
        %v399 = vld [vmem:[%s245 + $0x108] sm:$0xff]
        %v400 = vld [vmem:[%s245 + $0x110] sm:$0xff]
        %v401 = vld [vmem:[%s245 + $0x118] sm:$0xff]
        %v402 = vld [vmem:[%s245 + $0x120] sm:$0xff]
        %v403 = vld [vmem:[%s245 + $0x128] sm:$0xff]
        %v404 = vld [vmem:[%s245 + $0x130] sm:$0xff]
        %v405 = vld [vmem:[%s245 + $0x138] sm:$0xff]
        %v406 = vld [vmem:[%s245 + $0x140] sm:$0xff]
        %v407 = vld [vmem:[%s245 + $0x148] sm:$0xff]
        %v408 = vld [vmem:[%s245 + $0x150] sm:$0xff]
        %v409 = vld [vmem:[%s245 + $0x158] sm:$0xff]
        %v410 = vld [vmem:[%s245 + $0x160] sm:$0xff]
        %v411 = vld [vmem:[%s245 + $0x168] sm:$0xff]
        %v412 = vld [vmem:[%s245 + $0x170] sm:$0xff]
        %v413 = vld [vmem:[%s245 + $0x178] sm:$0xff]
        %v414 = vld [vmem:[%s245 + $0x180] sm:$0xff]
        %v415 = vld [vmem:[%s245 + $0x188] sm:$0xff]
        %v416 = vld [vmem:[%s245 + $0x190] sm:$0xff]
        %v417 = vld [vmem:[%s245 + $0x198] sm:$0xff]
        %v418 = vld [vmem:[%s245 + $0x1a0] sm:$0xff]
        %v419 = vld [vmem:[%s245 + $0x1a8] sm:$0xff]
        %v420 = vld [vmem:[%s245 + $0x1b0] sm:$0xff]
        %v421 = vld [vmem:[%s245 + $0x1b8] sm:$0xff]
        %v422 = vld [vmem:[%s245 + $0x1c0] sm:$0xff]
        %v423 = vld [vmem:[%s245 + $0x1c8] sm:$0xff]
        %v424 = vld [vmem:[%s245 + $0x1d0] sm:$0xff]
        %v425 = vld [vmem:[%s245 + $0x1d8] sm:$0xff]
        %v426 = vld [vmem:[%s245 + $0x1e0] sm:$0xff]
        %v427 = vld [vmem:[%s245 + $0x1e8] sm:$0xff]
        %v428 = vld [vmem:[%s245 + $0x1f0] sm:$0xff]
        %v429 = vld [vmem:[%s245 + $0x1f8] sm:$0xff]
        %v494 = vunpack.c.l.b16 %v366
        %v495 = vunpack.c.h.b16 %v366
        %v496 = vunpack.c.l.b16 %v367
        %v497 = vunpack.c.h.b16 %v367
        %v498 = vunpack.c.l.b16 %v368
        %v499 = vunpack.c.h.b16 %v368
        %v500 = vunpack.c.l.b16 %v369
        %v501 = vunpack.c.h.b16 %v369
        %v502 = vunpack.c.l.b16 %v370
        %v503 = vunpack.c.h.b16 %v370
        %v504 = vunpack.c.l.b16 %v371
        %v505 = vunpack.c.h.b16 %v371
        %v506 = vunpack.c.l.b16 %v372
        %v507 = vunpack.c.h.b16 %v372
        %v508 = vunpack.c.l.b16 %v373
        %v509 = vunpack.c.h.b16 %v373
        %v510 = vunpack.c.l.b16 %v374
        %v511 = vunpack.c.h.b16 %v374
        %v512 = vunpack.c.l.b16 %v375
        %v513 = vunpack.c.h.b16 %v375
        %v514 = vunpack.c.l.b16 %v376
        %v515 = vunpack.c.h.b16 %v376
        %v516 = vunpack.c.l.b16 %v377
        %v517 = vunpack.c.h.b16 %v377
        %v518 = vunpack.c.l.b16 %v378
        %v519 = vunpack.c.h.b16 %v378
        %v520 = vunpack.c.l.b16 %v379
        %v521 = vunpack.c.h.b16 %v379
        %v522 = vunpack.c.l.b16 %v380
        %v523 = vunpack.c.h.b16 %v380
        %v524 = vunpack.c.l.b16 %v381
        %v525 = vunpack.c.h.b16 %v381
        %v526 = vunpack.c.l.b16 %v382
        %v527 = vunpack.c.h.b16 %v382
        %v528 = vunpack.c.l.b16 %v383
        %v529 = vunpack.c.h.b16 %v383
        %v530 = vunpack.c.l.b16 %v384
        %v531 = vunpack.c.h.b16 %v384
        %v532 = vunpack.c.l.b16 %v385
        %v533 = vunpack.c.h.b16 %v385
        %v534 = vunpack.c.l.b16 %v386
        %v535 = vunpack.c.h.b16 %v386
        %v536 = vunpack.c.l.b16 %v387
        %v537 = vunpack.c.h.b16 %v387
        %v538 = vunpack.c.l.b16 %v388
        %v539 = vunpack.c.h.b16 %v388
        %v540 = vunpack.c.l.b16 %v389
        %v541 = vunpack.c.h.b16 %v389
        %v542 = vunpack.c.l.b16 %v390
        %v543 = vunpack.c.h.b16 %v390
        %v544 = vunpack.c.l.b16 %v391
        %v545 = vunpack.c.h.b16 %v391
        %v546 = vunpack.c.l.b16 %v392
        %v547 = vunpack.c.h.b16 %v392
        %v548 = vunpack.c.l.b16 %v393
        %v549 = vunpack.c.h.b16 %v393
        %v550 = vunpack.c.l.b16 %v394
        %v551 = vunpack.c.h.b16 %v394
        %v552 = vunpack.c.l.b16 %v395
        %v553 = vunpack.c.h.b16 %v395
        %v554 = vunpack.c.l.b16 %v396
        %v555 = vunpack.c.h.b16 %v396
        %v556 = vunpack.c.l.b16 %v397
        %v557 = vunpack.c.h.b16 %v397
        %v558 = vunpack.c.l.b16 %v398
        %v559 = vunpack.c.h.b16 %v398
        %v560 = vunpack.c.l.b16 %v399
        %v561 = vunpack.c.h.b16 %v399
        %v562 = vunpack.c.l.b16 %v400
        %v563 = vunpack.c.h.b16 %v400
        %v564 = vunpack.c.l.b16 %v401
        %v565 = vunpack.c.h.b16 %v401
        %v566 = vunpack.c.l.b16 %v402
        %v567 = vunpack.c.h.b16 %v402
        %v568 = vunpack.c.l.b16 %v403
        %v569 = vunpack.c.h.b16 %v403
        %v570 = vunpack.c.l.b16 %v404
        %v571 = vunpack.c.h.b16 %v404
        %v572 = vunpack.c.l.b16 %v405
        %v573 = vunpack.c.h.b16 %v405
        %v574 = vunpack.c.l.b16 %v406
        %v575 = vunpack.c.h.b16 %v406
        %v576 = vunpack.c.l.b16 %v407
        %v577 = vunpack.c.h.b16 %v407
        %v578 = vunpack.c.l.b16 %v408
        %v579 = vunpack.c.h.b16 %v408
        %v580 = vunpack.c.l.b16 %v409
        %v581 = vunpack.c.h.b16 %v409
        %v582 = vunpack.c.l.b16 %v410
        %v583 = vunpack.c.h.b16 %v410
        %v584 = vunpack.c.l.b16 %v411
        %v585 = vunpack.c.h.b16 %v411
        %v586 = vunpack.c.l.b16 %v412
        %v587 = vunpack.c.h.b16 %v412
        %v588 = vunpack.c.l.b16 %v413
        %v589 = vunpack.c.h.b16 %v413
        %v590 = vunpack.c.l.b16 %v414
        %v591 = vunpack.c.h.b16 %v414
        %v592 = vunpack.c.l.b16 %v415
        %v593 = vunpack.c.h.b16 %v415
        %v594 = vunpack.c.l.b16 %v416
        %v595 = vunpack.c.h.b16 %v416
        %v596 = vunpack.c.l.b16 %v417
        %v597 = vunpack.c.h.b16 %v417
        %v598 = vunpack.c.l.b16 %v418
        %v599 = vunpack.c.h.b16 %v418
        %v600 = vunpack.c.l.b16 %v419
        %v601 = vunpack.c.h.b16 %v419
        %v602 = vunpack.c.l.b16 %v420
        %v603 = vunpack.c.h.b16 %v420
        %v604 = vunpack.c.l.b16 %v421
        %v605 = vunpack.c.h.b16 %v421
        %v606 = vunpack.c.l.b16 %v422
        %v607 = vunpack.c.h.b16 %v422
        %v608 = vunpack.c.l.b16 %v423
        %v609 = vunpack.c.h.b16 %v423
        %v610 = vunpack.c.l.b16 %v424
        %v611 = vunpack.c.h.b16 %v424
        %v612 = vunpack.c.l.b16 %v425
        %v613 = vunpack.c.h.b16 %v425
        %v614 = vunpack.c.l.b16 %v426
        %v615 = vunpack.c.h.b16 %v426
        %v616 = vunpack.c.l.b16 %v427
        %v617 = vunpack.c.h.b16 %v427
        %v618 = vunpack.c.l.b16 %v428
        %v619 = vunpack.c.h.b16 %v428
        %v620 = vunpack.c.l.b16 %v429
        %v621 = vunpack.c.h.b16 %v429
        %v622 = vpack.c.b16 %v502, %v494
        %v623 = vpack.c.b16 %v503, %v495
        %v624 = vpack.c.b16 %v504, %v496
        %v625 = vpack.c.b16 %v505, %v497
        %v626 = vpack.c.b16 %v506, %v498
        %v627 = vpack.c.b16 %v507, %v499
        %v628 = vpack.c.b16 %v508, %v500
        %v629 = vpack.c.b16 %v509, %v501
        %v630 = vpack.c.b16 %v518, %v510
        %v631 = vpack.c.b16 %v519, %v511
        %v632 = vpack.c.b16 %v520, %v512
        %v633 = vpack.c.b16 %v521, %v513
        %v634 = vpack.c.b16 %v522, %v514
        %v635 = vpack.c.b16 %v523, %v515
        %v636 = vpack.c.b16 %v524, %v516
        %v637 = vpack.c.b16 %v525, %v517
        %v638 = vpack.c.b16 %v534, %v526
        %v639 = vpack.c.b16 %v535, %v527
        %v640 = vpack.c.b16 %v536, %v528
        %v641 = vpack.c.b16 %v537, %v529
        %v642 = vpack.c.b16 %v538, %v530
        %v643 = vpack.c.b16 %v539, %v531
        %v644 = vpack.c.b16 %v540, %v532
        %v645 = vpack.c.b16 %v541, %v533
        %v646 = vpack.c.b16 %v550, %v542
        %v647 = vpack.c.b16 %v551, %v543
        %v648 = vpack.c.b16 %v552, %v544
        %v649 = vpack.c.b16 %v553, %v545
        %v650 = vpack.c.b16 %v554, %v546
        %v651 = vpack.c.b16 %v555, %v547
        %v652 = vpack.c.b16 %v556, %v548
        %v653 = vpack.c.b16 %v557, %v549
        %v654 = vpack.c.b16 %v566, %v558
        %v655 = vpack.c.b16 %v567, %v559
        %v656 = vpack.c.b16 %v568, %v560
        %v657 = vpack.c.b16 %v569, %v561
        %v658 = vpack.c.b16 %v570, %v562
        %v659 = vpack.c.b16 %v571, %v563
        %v660 = vpack.c.b16 %v572, %v564
        %v661 = vpack.c.b16 %v573, %v565
        %v662 = vpack.c.b16 %v582, %v574
        %v663 = vpack.c.b16 %v583, %v575
        %v664 = vpack.c.b16 %v584, %v576
        %v665 = vpack.c.b16 %v585, %v577
        %v666 = vpack.c.b16 %v586, %v578
        %v667 = vpack.c.b16 %v587, %v579
        %v668 = vpack.c.b16 %v588, %v580
        %v669 = vpack.c.b16 %v589, %v581
        %v670 = vpack.c.b16 %v598, %v590
        %v671 = vpack.c.b16 %v599, %v591
        %v672 = vpack.c.b16 %v600, %v592
        %v673 = vpack.c.b16 %v601, %v593
        %v674 = vpack.c.b16 %v602, %v594
        %v675 = vpack.c.b16 %v603, %v595
        %v676 = vpack.c.b16 %v604, %v596
        %v677 = vpack.c.b16 %v605, %v597
        %v678 = vpack.c.b16 %v614, %v606
        %v679 = vpack.c.b16 %v615, %v607
        %v680 = vpack.c.b16 %v616, %v608
        %v681 = vpack.c.b16 %v617, %v609
        %v682 = vpack.c.b16 %v618, %v610
        %v683 = vpack.c.b16 %v619, %v611
        %v684 = vpack.c.b16 %v620, %v612
        %v685 = vpack.c.b16 %v621, %v613
        %750 = vmatprep.subr.bf16.mxu0 %v623
        %751 = vmatpush1.bf16.msra.mxu0 %v622
        %752 = vmatprep.subr.bf16.mxu0 %v631
        %753 = vmatpush1.bf16.msra.mxu0 %v630
        %754 = vmatprep.subr.bf16.mxu0 %v639
        %755 = vmatpush1.bf16.msra.mxu0 %v638
        %756 = vmatprep.subr.bf16.mxu0 %v647
        %757 = vmatpush1.bf16.msra.mxu0 %v646
        %758 = vmatprep.subr.bf16.mxu0 %v655
        %759 = vmatpush1.bf16.msra.mxu0 %v654
        %760 = vmatprep.subr.bf16.mxu0 %v663
        %761 = vmatpush1.bf16.msra.mxu0 %v662
        %762 = vmatprep.subr.bf16.mxu0 %v671
        %763 = vmatpush1.bf16.msra.mxu0 %v670
        %764 = vmatprep.subr.bf16.mxu0 %v679
        %765 = vmatpush1.bf16.msra.mxu0 %v678
        %766 = vmatprep.subr.bf16.mxu0 0
        %767 = vmatpush1.bf16.msra.mxu0 0
        %768 = vmatprep.subr.bf16.mxu0 0
        %769 = vmatpush1.bf16.msra.mxu0 0
        %770 = vmatprep.subr.bf16.mxu0 0
        %771 = vmatpush1.bf16.msra.mxu0 0
        %772 = vmatprep.subr.bf16.mxu0 0
        %773 = vmatpush1.bf16.msra.mxu0 0
        %774 = vmatprep.subr.bf16.mxu0 0
        %775 = vmatpush1.bf16.msra.mxu0 0
        %776 = vmatprep.subr.bf16.mxu0 0
        %777 = vmatpush1.bf16.msra.mxu0 0
        %778 = vmatprep.subr.bf16.mxu0 0
        %779 = vmatpush1.bf16.msra.mxu0 0
        %780 = vmatprep.subr.bf16.mxu0 0
        %781 = vmatpush1.bf16.msra.mxu0 0
        %782 = vmatprep.mubr.bf16.mxu0 0
        %783 = vmatmul.mubr.bf16.gmra.mrb[0].mxu0 %v364
        %v784 = vpop.f32.mrb[0].mxu0
        %v785 = vadd.f32 0.0, %v784
        %v786 = vpop.f32.mrb[0].mxu0
        %v787 = vadd.f32 0.0, %v786
        %v788 = vpop.f32.mrb[0].mxu0
        %v789 = vadd.f32 0.0, %v788
        %v790 = vpop.f32.mrb[0].mxu0
        %v791 = vadd.f32 0.0, %v790
        %792 = vmatprep.mubr.bf16.mxu0 0
        %793 = vmatmul.mubr.bf16.gmra.mrb[0].mxu0 %v365
        %v794 = vpop.f32.mrb[0].mxu0
        %v795 = vadd.f32 0.0, %v794
        %v796 = vpop.f32.mrb[0].mxu0
        %v797 = vadd.f32 0.0, %v796
        %v798 = vpop.f32.mrb[0].mxu0
        %v799 = vadd.f32 0.0, %v798
        %v800 = vpop.f32.mrb[0].mxu0
        %v801 = vadd.f32 0.0, %v800
        %802 = vdwg.mxu0
        %803 = vmatprep.subr.bf16.mxu0 %v625
        %804 = vmatpush1.bf16.msra.mxu0 %v624
        %805 = vmatprep.subr.bf16.mxu0 %v633
        %806 = vmatpush1.bf16.msra.mxu0 %v632
        %807 = vmatprep.subr.bf16.mxu0 %v641
        %808 = vmatpush1.bf16.msra.mxu0 %v640
        %809 = vmatprep.subr.bf16.mxu0 %v649
        %810 = vmatpush1.bf16.msra.mxu0 %v648
        %811 = vmatprep.subr.bf16.mxu0 %v657
        %812 = vmatpush1.bf16.msra.mxu0 %v656
        %813 = vmatprep.subr.bf16.mxu0 %v665
        %814 = vmatpush1.bf16.msra.mxu0 %v664
        %815 = vmatprep.subr.bf16.mxu0 %v673
        %816 = vmatpush1.bf16.msra.mxu0 %v672
        %817 = vmatprep.subr.bf16.mxu0 %v681
        %818 = vmatpush1.bf16.msra.mxu0 %v680
        %819 = vmatprep.subr.bf16.mxu0 0
        %820 = vmatpush1.bf16.msra.mxu0 0
        %821 = vmatprep.subr.bf16.mxu0 0
        %822 = vmatpush1.bf16.msra.mxu0 0
        %823 = vmatprep.subr.bf16.mxu0 0
        %824 = vmatpush1.bf16.msra.mxu0 0
        %825 = vmatprep.subr.bf16.mxu0 0
        %826 = vmatpush1.bf16.msra.mxu0 0
        %827 = vmatprep.subr.bf16.mxu0 0
        %828 = vmatpush1.bf16.msra.mxu0 0
        %829 = vmatprep.subr.bf16.mxu0 0
        %830 = vmatpush1.bf16.msra.mxu0 0
        %831 = vmatprep.subr.bf16.mxu0 0
        %832 = vmatpush1.bf16.msra.mxu0 0
        %833 = vmatprep.subr.bf16.mxu0 0
        %834 = vmatpush1.bf16.msra.mxu0 0
        %835 = vmatprep.mubr.bf16.mxu0 0
        %836 = vmatmul.mubr.bf16.gmra.mrb[0].mxu0 %v364
        %v837 = vpop.f32.mrb[0].mxu0
        %v838 = vadd.f32 0.0, %v837
        %v839 = vpop.f32.mrb[0].mxu0
        %v840 = vadd.f32 0.0, %v839
        %v841 = vpop.f32.mrb[0].mxu0
        %v842 = vadd.f32 0.0, %v841
        %v843 = vpop.f32.mrb[0].mxu0
        %v844 = vadd.f32 0.0, %v843
        %845 = vmatprep.mubr.bf16.mxu0 0
        %846 = vmatmul.mubr.bf16.gmra.mrb[0].mxu0 %v365
        %v847 = vpop.f32.mrb[0].mxu0
        %v848 = vadd.f32 0.0, %v847
        %v849 = vpop.f32.mrb[0].mxu0
        %v850 = vadd.f32 0.0, %v849
        %v851 = vpop.f32.mrb[0].mxu0
        %v852 = vadd.f32 0.0, %v851
        %v853 = vpop.f32.mrb[0].mxu0
        %v854 = vadd.f32 0.0, %v853
        %855 = vdwg.mxu0
        %856 = vmatprep.subr.bf16.mxu0 %v627
        %857 = vmatpush1.bf16.msra.mxu0 %v626
        %858 = vmatprep.subr.bf16.mxu0 %v635
        %859 = vmatpush1.bf16.msra.mxu0 %v634
        %860 = vmatprep.subr.bf16.mxu0 %v643
        %861 = vmatpush1.bf16.msra.mxu0 %v642
        %862 = vmatprep.subr.bf16.mxu0 %v651
        %863 = vmatpush1.bf16.msra.mxu0 %v650
        %864 = vmatprep.subr.bf16.mxu0 %v659
        %865 = vmatpush1.bf16.msra.mxu0 %v658
        %866 = vmatprep.subr.bf16.mxu0 %v667
        %867 = vmatpush1.bf16.msra.mxu0 %v666
        %868 = vmatprep.subr.bf16.mxu0 %v675
        %869 = vmatpush1.bf16.msra.mxu0 %v674
        %870 = vmatprep.subr.bf16.mxu0 %v683
        %871 = vmatpush1.bf16.msra.mxu0 %v682
        %872 = vmatprep.subr.bf16.mxu0 0
        %873 = vmatpush1.bf16.msra.mxu0 0
        %874 = vmatprep.subr.bf16.mxu0 0
        %875 = vmatpush1.bf16.msra.mxu0 0
        %876 = vmatprep.subr.bf16.mxu0 0
        %877 = vmatpush1.bf16.msra.mxu0 0
        %878 = vmatprep.subr.bf16.mxu0 0
        %879 = vmatpush1.bf16.msra.mxu0 0
        %880 = vmatprep.subr.bf16.mxu0 0
        %881 = vmatpush1.bf16.msra.mxu0 0
        %882 = vmatprep.subr.bf16.mxu0 0
        %883 = vmatpush1.bf16.msra.mxu0 0
        %884 = vmatprep.subr.bf16.mxu0 0
        %885 = vmatpush1.bf16.msra.mxu0 0
        %886 = vmatprep.subr.bf16.mxu0 0
        %887 = vmatpush1.bf16.msra.mxu0 0
        %888 = vmatprep.mubr.bf16.mxu0 0
        %889 = vmatmul.mubr.bf16.gmra.mrb[0].mxu0 %v364
        %v890 = vpop.f32.mrb[0].mxu0
        %v891 = vadd.f32 0.0, %v890
        %v892 = vpop.f32.mrb[0].mxu0
        %v893 = vadd.f32 0.0, %v892
        %v894 = vpop.f32.mrb[0].mxu0
        %v895 = vadd.f32 0.0, %v894
        %v896 = vpop.f32.mrb[0].mxu0
        %v897 = vadd.f32 0.0, %v896
        %898 = vmatprep.mubr.bf16.mxu0 0
        %899 = vmatmul.mubr.bf16.gmra.mrb[0].mxu0 %v365
        %v900 = vpop.f32.mrb[0].mxu0
        %v901 = vadd.f32 0.0, %v900
        %v902 = vpop.f32.mrb[0].mxu0
        %v903 = vadd.f32 0.0, %v902
        %v904 = vpop.f32.mrb[0].mxu0
        %v905 = vadd.f32 0.0, %v904
        %v906 = vpop.f32.mrb[0].mxu0
        %v907 = vadd.f32 0.0, %v906
        %908 = vdwg.mxu0
        %909 = vmatprep.subr.bf16.mxu0 %v629
        %910 = vmatpush1.bf16.msra.mxu0 %v628
        %911 = vmatprep.subr.bf16.mxu0 %v637
        %912 = vmatpush1.bf16.msra.mxu0 %v636
        %913 = vmatprep.subr.bf16.mxu0 %v645
        %914 = vmatpush1.bf16.msra.mxu0 %v644
        %915 = vmatprep.subr.bf16.mxu0 %v653
        %916 = vmatpush1.bf16.msra.mxu0 %v652
        %917 = vmatprep.subr.bf16.mxu0 %v661
        %918 = vmatpush1.bf16.msra.mxu0 %v660
        %919 = vmatprep.subr.bf16.mxu0 %v669
        %920 = vmatpush1.bf16.msra.mxu0 %v668
        %921 = vmatprep.subr.bf16.mxu0 %v677
        %922 = vmatpush1.bf16.msra.mxu0 %v676
        %923 = vmatprep.subr.bf16.mxu0 %v685
        %924 = vmatpush1.bf16.msra.mxu0 %v684
        %925 = vmatprep.subr.bf16.mxu0 0
        %926 = vmatpush1.bf16.msra.mxu0 0
        %927 = vmatprep.subr.bf16.mxu0 0
        %928 = vmatpush1.bf16.msra.mxu0 0
        %929 = vmatprep.subr.bf16.mxu0 0
        %930 = vmatpush1.bf16.msra.mxu0 0
        %931 = vmatprep.subr.bf16.mxu0 0
        %932 = vmatpush1.bf16.msra.mxu0 0
        %933 = vmatprep.subr.bf16.mxu0 0
        %934 = vmatpush1.bf16.msra.mxu0 0
        %935 = vmatprep.subr.bf16.mxu0 0
        %936 = vmatpush1.bf16.msra.mxu0 0
        %937 = vmatprep.subr.bf16.mxu0 0
        %938 = vmatpush1.bf16.msra.mxu0 0
        %939 = vmatprep.subr.bf16.mxu0 0
        %940 = vmatpush1.bf16.msra.mxu0 0
        %941 = vmatprep.mubr.bf16.mxu0 0
        %942 = vmatmul.mubr.bf16.gmra.mrb[0].mxu0 %v364
        %v943 = vpop.f32.mrb[0].mxu0
        %v944 = vadd.f32 0.0, %v943
        %v945 = vpop.f32.mrb[0].mxu0
        %v946 = vadd.f32 0.0, %v945
        %v947 = vpop.f32.mrb[0].mxu0
        %v948 = vadd.f32 0.0, %v947
        %v949 = vpop.f32.mrb[0].mxu0
        %v950 = vadd.f32 0.0, %v949
        %951 = vmatprep.mubr.bf16.mxu0 0
        %952 = vmatmul.mubr.bf16.gmra.mrb[0].mxu0 %v365
        %v953 = vpop.f32.mrb[0].mxu0
        %v954 = vadd.f32 0.0, %v953
        %v955 = vpop.f32.mrb[0].mxu0
        %v956 = vadd.f32 0.0, %v955
        %v957 = vpop.f32.mrb[0].mxu0
        %v958 = vadd.f32 0.0, %v957
        %v959 = vpop.f32.mrb[0].mxu0
        %v960 = vadd.f32 0.0, %v959
        %961 = vdwg.mxu0
        %v962 = vxor.u32 %v838, 2147483648
        %v963 = vxor.u32 %v840, 2147483648
        %v964 = vxor.u32 %v842, 2147483648
        %v965 = vxor.u32 %v844, 2147483648
        %v966 = vxor.u32 %v848, 2147483648
        %v967 = vxor.u32 %v850, 2147483648
        %v968 = vxor.u32 %v852, 2147483648
        %v969 = vxor.u32 %v854, 2147483648
        %v970 = vmul.f32 %v962, 1.442695
        %v971 = vpow.pop %v970
        %v972 = vmul.f32 %v963, 1.442695
        %v973 = vpow.pop %v972
        %v974 = vmul.f32 %v964, 1.442695
        %v975 = vpow.pop %v974
        %v976 = vmul.f32 %v965, 1.442695
        %v977 = vpow.pop %v976
        %v978 = vmul.f32 %v966, 1.442695
        %v979 = vpow.pop %v978
        %v980 = vmul.f32 %v967, 1.442695
        %v981 = vpow.pop %v980
        %v982 = vmul.f32 %v968, 1.442695
        %v983 = vpow.pop %v982
        %v984 = vmul.f32 %v969, 1.442695
        %v985 = vpow.pop %v984
        %v986 = vadd.f32 %v971, 1.0
        %v987 = vadd.f32 %v973, 1.0
        %v988 = vadd.f32 %v975, 1.0
        %v989 = vadd.f32 %v977, 1.0
        %v990 = vadd.f32 %v979, 1.0
        %v991 = vadd.f32 %v981, 1.0
        %v992 = vadd.f32 %v983, 1.0
        %v993 = vadd.f32 %v985, 1.0
        %v994 = vrcp.pop %v986
        %v995 = vmul.f32 1.0, %v994
        %v996 = vrcp.pop %v987
        %v997 = vmul.f32 1.0, %v996
        %v998 = vrcp.pop %v988
        %v999 = vmul.f32 1.0, %v998
        %v1000 = vrcp.pop %v989
        %v1001 = vmul.f32 1.0, %v1000
        %v1002 = vrcp.pop %v990
        %v1003 = vmul.f32 1.0, %v1002
        %v1004 = vrcp.pop %v991
        %v1005 = vmul.f32 1.0, %v1004
        %v1006 = vrcp.pop %v992
        %v1007 = vmul.f32 1.0, %v1006
        %v1008 = vrcp.pop %v993
        %v1009 = vmul.f32 1.0, %v1008
        %v1010 = vxor.u32 %v891, 2147483648
        %v1011 = vxor.u32 %v893, 2147483648
        %v1012 = vxor.u32 %v895, 2147483648
        %v1013 = vxor.u32 %v897, 2147483648
        %v1014 = vxor.u32 %v901, 2147483648
        %v1015 = vxor.u32 %v903, 2147483648
        %v1016 = vxor.u32 %v905, 2147483648
        %v1017 = vxor.u32 %v907, 2147483648
        %v1018 = vmul.f32 %v1010, 1.442695
        %v1019 = vpow.pop %v1018
        %v1020 = vmul.f32 %v1011, 1.442695
        %v1021 = vpow.pop %v1020
        %v1022 = vmul.f32 %v1012, 1.442695
        %v1023 = vpow.pop %v1022
        %v1024 = vmul.f32 %v1013, 1.442695
        %v1025 = vpow.pop %v1024
        %v1026 = vmul.f32 %v1014, 1.442695
        %v1027 = vpow.pop %v1026
        %v1028 = vmul.f32 %v1015, 1.442695
        %v1029 = vpow.pop %v1028
        %v1030 = vmul.f32 %v1016, 1.442695
        %v1031 = vpow.pop %v1030
        %v1032 = vmul.f32 %v1017, 1.442695
        %v1033 = vpow.pop %v1032
        %v1034 = vadd.f32 %v1019, 1.0
        %v1035 = vadd.f32 %v1021, 1.0
        %v1036 = vadd.f32 %v1023, 1.0
        %v1037 = vadd.f32 %v1025, 1.0
        %v1038 = vadd.f32 %v1027, 1.0
        %v1039 = vadd.f32 %v1029, 1.0
        %v1040 = vadd.f32 %v1031, 1.0
        %v1041 = vadd.f32 %v1033, 1.0
        %v1042 = vrcp.pop %v1034
        %v1043 = vmul.f32 1.0, %v1042
        %v1044 = vrcp.pop %v1035
        %v1045 = vmul.f32 1.0, %v1044
        %v1046 = vrcp.pop %v1036
        %v1047 = vmul.f32 1.0, %v1046
        %v1048 = vrcp.pop %v1037
        %v1049 = vmul.f32 1.0, %v1048
        %v1050 = vrcp.pop %v1038
        %v1051 = vmul.f32 1.0, %v1050
        %v1052 = vrcp.pop %v1039
        %v1053 = vmul.f32 1.0, %v1052
        %v1054 = vrcp.pop %v1040
        %v1055 = vmul.f32 1.0, %v1054
        %v1056 = vrcp.pop %v1041
        %v1057 = vmul.f32 1.0, %v1056
        %v1058 = vadd.f32 %v995, %v1043
        %v1059 = vadd.f32 %v997, %v1045
        %v1060 = vadd.f32 %v999, %v1047
        %v1061 = vadd.f32 %v1001, %v1049
        %v1062 = vadd.f32 %v1003, %v1051
        %v1063 = vadd.f32 %v1005, %v1053
        %v1064 = vadd.f32 %v1007, %v1055
        %v1065 = vadd.f32 %v1009, %v1057
        %v1066 = vadd.f32 %v1058, 0.0001
        %v1067 = vadd.f32 %v1059, 0.0001
        %v1068 = vadd.f32 %v1060, 0.0001
        %v1069 = vadd.f32 %v1061, 0.0001
        %v1070 = vadd.f32 %v1062, 0.0001
        %v1071 = vadd.f32 %v1063, 0.0001
        %v1072 = vadd.f32 %v1064, 0.0001
        %v1073 = vadd.f32 %v1065, 0.0001
        %v1074 = vrcp.pop %v1066
        %v1075 = vrcp.pop %v1067
        %v1076 = vrcp.pop %v1068
        %v1077 = vrcp.pop %v1069
        %v1078 = vrcp.pop %v1070
        %v1079 = vrcp.pop %v1071
        %v1080 = vrcp.pop %v1072
        %v1081 = vrcp.pop %v1073
        %v1082 = vmul.f32 %v995, %v1074
        %v1083 = vmul.f32 %v997, %v1075
        %v1084 = vmul.f32 %v999, %v1076
        %v1085 = vmul.f32 %v1001, %v1077
        %v1086 = vmul.f32 %v1003, %v1078
        %v1087 = vmul.f32 %v1005, %v1079
        %v1088 = vmul.f32 %v1007, %v1080
        %v1089 = vmul.f32 %v1009, %v1081
        %v1090 = vmul.f32 %v944, %v1043
        %v1091 = vmul.f32 %v946, %v1045
        %v1092 = vmul.f32 %v948, %v1047
        %v1093 = vmul.f32 %v950, %v1049
        %v1094 = vmul.f32 %v954, %v1051
        %v1095 = vmul.f32 %v956, %v1053
        %v1096 = vmul.f32 %v958, %v1055
        %v1097 = vmul.f32 %v960, %v1057
        %v1098 = vmul.f32 %v1090, %v1074
        %v1099 = vmul.f32 %v1091, %v1075
        %v1100 = vmul.f32 %v1092, %v1076
        %v1101 = vmul.f32 %v1093, %v1077
        %v1102 = vmul.f32 %v1094, %v1078
        %v1103 = vmul.f32 %v1095, %v1079
        %v1104 = vmul.f32 %v1096, %v1080
        %v1105 = vmul.f32 %v1097, %v1081
        %v1106 = vlaneseq
        %v1107 = vshrl.u32 %v1106, 7
        %v1108 = vadd.s32 %v1107, 8
        %v1109 = vadd.s32 %v1107, 16
        %v1110 = vadd.s32 %v1107, 24
        %vm1111 = vcmp.lt.s32.totalorder %v1107, 0
        %v1112 = vsub.s32 0, %v1107
        %v1113 = vsel %vm1111, %v1112, %v1107
        %v1114 = vshrl.u32 %v1113, 4
        %v1115 = vand.u32 %v1113, 15
        %v1116 = vsub.s32 0, %v1115
        %v1117 = vsel %vm1111, %v1116, %v1115
        %vm1118 = vcmp.lt.s32.totalorder %v1108, 0
        %v1119 = vsub.s32 0, %v1108
        %v1120 = vsel %vm1118, %v1119, %v1108
        %v1121 = vshrl.u32 %v1120, 4
        %v1122 = vand.u32 %v1120, 15
        %v1123 = vsub.s32 0, %v1122
        %v1124 = vsel %vm1118, %v1123, %v1122
        %vm1125 = vcmp.lt.s32.totalorder %v1109, 0
        %v1126 = vsub.s32 0, %v1109
        %v1127 = vsel %vm1125, %v1126, %v1109
        %v1128 = vshrl.u32 %v1127, 4
        %v1129 = vand.u32 %v1127, 15
        %v1130 = vsub.s32 0, %v1129
        %v1131 = vsel %vm1125, %v1130, %v1129
        %vm1132 = vcmp.lt.s32.totalorder %v1110, 0
        %v1133 = vsub.s32 0, %v1110
        %v1134 = vsel %vm1132, %v1133, %v1110
        %v1135 = vshrl.u32 %v1134, 4
        %v1136 = vand.u32 %v1134, 15
        %v1137 = vsub.s32 0, %v1136
        %v1138 = vsel %vm1132, %v1137, %v1136
        %vm1139 = vcmp.ne.s32.totalorder %v1117, 0
        %vm1140 = vcmp.ne.s32.totalorder %v1124, 0
        %vm1141 = vcmp.ne.s32.totalorder %v1131, 0
        %vm1142 = vcmp.ne.s32.totalorder %v1138, 0
        %vm1143 = vcmp.lt.s32.totalorder %v1117, 0
        %vm1144 = vcmp.lt.s32.totalorder %v1124, 0
        %vm1145 = vcmp.lt.s32.totalorder %v1131, 0
        %vm1146 = vcmp.lt.s32.totalorder %v1138, 0
        %vm1147 = vmand %vm1143, %vm1139
        %vm1148 = vmand %vm1144, %vm1140
        %vm1149 = vmand %vm1145, %vm1141
        %vm1150 = vmand %vm1146, %vm1142
        %v1151 = vadd.s32 %v1117, 16
        %v1152 = vadd.s32 %v1124, 16
        %v1153 = vadd.s32 %v1131, 16
        %v1154 = vadd.s32 %v1138, 16
        %v1155 = vsel %vm1147, %v1151, %v1117
        %v1156 = vsel %vm1148, %v1152, %v1124
        %v1157 = vsel %vm1149, %v1153, %v1131
        %v1158 = vsel %vm1150, %v1154, %v1138
        %vm1159 = vcmp.ge.s32.totalorder %v1155, 1
        %vm1160 = vcmp.ge.s32.totalorder %v1156, 1
        %vm1161 = vcmp.ge.s32.totalorder %v1157, 1
        %vm1162 = vcmp.ge.s32.totalorder %v1158, 1
        %v1163 = vrot.slane %v1082, 7
        %v1164 = vrot.slane %v1083, 7
        %v1165 = vrot.slane %v1084, 7
        %v1166 = vrot.slane %v1085, 7
        %v1167 = vrot.slane %v1086, 7
        %v1168 = vrot.slane %v1087, 7
        %v1169 = vrot.slane %v1088, 7
        %v1170 = vrot.slane %v1089, 7
        %vm1171 = vcmp.lt.s32.totalorder %v1107, 1
        %v1172 = vsel %vm1171, %v1167, %v1169
        %v1173 = vsel %vm1171, %v1168, %v1170
        %v1174 = vsel %vm1171, %v1165, %v1167
        %v1175 = vsel %vm1171, %v1166, %v1168
        %v1176 = vsel %vm1171, %v1163, %v1165
        %v1177 = vsel %vm1171, %v1164, %v1166
        %v1178 = vsel %vm1171, %v1169, %v1163
        %v1179 = vsel %vm1171, %v1170, %v1164
        %v1180 = vsel %vm1159, %v1178, 1.0
        %v1181 = vsel %vm1159, %v1179, 1.0
        %v1182 = vsel %vm1160, %v1176, 1.0
        %v1183 = vsel %vm1160, %v1177, 1.0
        %v1184 = vsel %vm1161, %v1174, 1.0
        %v1185 = vsel %vm1161, %v1175, 1.0
        %v1186 = vsel %vm1162, %v1172, 1.0
        %v1187 = vsel %vm1162, %v1173, 1.0
        %v1188 = vrot.slane %v1098, 7
        %v1189 = vrot.slane %v1099, 7
        %v1190 = vrot.slane %v1100, 7
        %v1191 = vrot.slane %v1101, 7
        %v1192 = vrot.slane %v1102, 7
        %v1193 = vrot.slane %v1103, 7
        %v1194 = vrot.slane %v1104, 7
        %v1195 = vrot.slane %v1105, 7
        %v1196 = vsel %vm1171, %v1192, %v1194
        %v1197 = vsel %vm1171, %v1193, %v1195
        %v1198 = vsel %vm1171, %v1190, %v1192
        %v1199 = vsel %vm1171, %v1191, %v1193
        %v1200 = vsel %vm1171, %v1188, %v1190
        %v1201 = vsel %vm1171, %v1189, %v1191
        %v1202 = vsel %vm1171, %v1194, %v1188
        %v1203 = vsel %vm1171, %v1195, %v1189
        %v1204 = vsel %vm1159, %v1202, 0.0
        %v1205 = vsel %vm1159, %v1203, 0.0
        %v1206 = vsel %vm1160, %v1200, 0.0
        %v1207 = vsel %vm1160, %v1201, 0.0
        %v1208 = vsel %vm1161, %v1198, 0.0
        %v1209 = vsel %vm1161, %v1199, 0.0
        %v1210 = vsel %vm1162, %v1196, 0.0
        %v1211 = vsel %vm1162, %v1197, 0.0
        %v1212 = vmul.f32 %v1082, %v1204
        %v1213 = vmul.f32 %v1083, %v1205
        %v1214 = vmul.f32 %v1084, %v1206
        %v1215 = vmul.f32 %v1085, %v1207
        %v1216 = vmul.f32 %v1086, %v1208
        %v1217 = vmul.f32 %v1087, %v1209
        %v1218 = vmul.f32 %v1088, %v1210
        %v1219 = vmul.f32 %v1089, %v1211
        %v1220 = vadd.f32 %v1212, %v1098
        %v1221 = vadd.f32 %v1213, %v1099
        %v1222 = vadd.f32 %v1214, %v1100
        %v1223 = vadd.f32 %v1215, %v1101
        %v1224 = vadd.f32 %v1216, %v1102
        %v1225 = vadd.f32 %v1217, %v1103
        %v1226 = vadd.f32 %v1218, %v1104
        %v1227 = vadd.f32 %v1219, %v1105
        %v1228 = vmul.f32 %v1082, %v1180
        %v1229 = vmul.f32 %v1083, %v1181
        %v1230 = vmul.f32 %v1084, %v1182
        %v1231 = vmul.f32 %v1085, %v1183
        %v1232 = vmul.f32 %v1086, %v1184
        %v1233 = vmul.f32 %v1087, %v1185
        %v1234 = vmul.f32 %v1088, %v1186
        %v1235 = vmul.f32 %v1089, %v1187
        %vm1236 = vcmp.ge.s32.totalorder %v1155, 2
        %vm1237 = vcmp.ge.s32.totalorder %v1156, 2
        %vm1238 = vcmp.ge.s32.totalorder %v1157, 2
        %vm1239 = vcmp.ge.s32.totalorder %v1158, 2
        %v1240 = vrot.slane %v1228, 6
        %v1241 = vrot.slane %v1229, 6
        %v1242 = vrot.slane %v1230, 6
        %v1243 = vrot.slane %v1231, 6
        %v1244 = vrot.slane %v1232, 6
        %v1245 = vrot.slane %v1233, 6
        %v1246 = vrot.slane %v1234, 6
        %v1247 = vrot.slane %v1235, 6
        %vm1248 = vcmp.lt.s32.totalorder %v1107, 2
        %v1249 = vsel %vm1248, %v1244, %v1246
        %v1250 = vsel %vm1248, %v1245, %v1247
        %v1251 = vsel %vm1248, %v1242, %v1244
        %v1252 = vsel %vm1248, %v1243, %v1245
        %v1253 = vsel %vm1248, %v1240, %v1242
        %v1254 = vsel %vm1248, %v1241, %v1243
        %v1255 = vsel %vm1248, %v1246, %v1240
        %v1256 = vsel %vm1248, %v1247, %v1241
        %v1257 = vsel %vm1236, %v1255, 1.0
        %v1258 = vsel %vm1236, %v1256, 1.0
        %v1259 = vsel %vm1237, %v1253, 1.0
        %v1260 = vsel %vm1237, %v1254, 1.0
        %v1261 = vsel %vm1238, %v1251, 1.0
        %v1262 = vsel %vm1238, %v1252, 1.0
        %v1263 = vsel %vm1239, %v1249, 1.0
        %v1264 = vsel %vm1239, %v1250, 1.0
        %v1265 = vrot.slane %v1220, 6
        %v1266 = vrot.slane %v1221, 6
        %v1267 = vrot.slane %v1222, 6
        %v1268 = vrot.slane %v1223, 6
        %v1269 = vrot.slane %v1224, 6
        %v1270 = vrot.slane %v1225, 6
        %v1271 = vrot.slane %v1226, 6
        %v1272 = vrot.slane %v1227, 6
        %v1273 = vsel %vm1248, %v1269, %v1271
        %v1274 = vsel %vm1248, %v1270, %v1272
        %v1275 = vsel %vm1248, %v1267, %v1269
        %v1276 = vsel %vm1248, %v1268, %v1270
        %v1277 = vsel %vm1248, %v1265, %v1267
        %v1278 = vsel %vm1248, %v1266, %v1268
        %v1279 = vsel %vm1248, %v1271, %v1265
        %v1280 = vsel %vm1248, %v1272, %v1266
        %v1281 = vsel %vm1236, %v1279, 0.0
        %v1282 = vsel %vm1236, %v1280, 0.0
        %v1283 = vsel %vm1237, %v1277, 0.0
        %v1284 = vsel %vm1237, %v1278, 0.0
        %v1285 = vsel %vm1238, %v1275, 0.0
        %v1286 = vsel %vm1238, %v1276, 0.0
        %v1287 = vsel %vm1239, %v1273, 0.0
        %v1288 = vsel %vm1239, %v1274, 0.0
        %v1289 = vmul.f32 %v1228, %v1281
        %v1290 = vmul.f32 %v1229, %v1282
        %v1291 = vmul.f32 %v1230, %v1283
        %v1292 = vmul.f32 %v1231, %v1284
        %v1293 = vmul.f32 %v1232, %v1285
        %v1294 = vmul.f32 %v1233, %v1286
        %v1295 = vmul.f32 %v1234, %v1287
        %v1296 = vmul.f32 %v1235, %v1288
        %v1297 = vadd.f32 %v1289, %v1220
        %v1298 = vadd.f32 %v1290, %v1221
        %v1299 = vadd.f32 %v1291, %v1222
        %v1300 = vadd.f32 %v1292, %v1223
        %v1301 = vadd.f32 %v1293, %v1224
        %v1302 = vadd.f32 %v1294, %v1225
        %v1303 = vadd.f32 %v1295, %v1226
        %v1304 = vadd.f32 %v1296, %v1227
        %v1305 = vmul.f32 %v1228, %v1257
        %v1306 = vmul.f32 %v1229, %v1258
        %v1307 = vmul.f32 %v1230, %v1259
        %v1308 = vmul.f32 %v1231, %v1260
        %v1309 = vmul.f32 %v1232, %v1261
        %v1310 = vmul.f32 %v1233, %v1262
        %v1311 = vmul.f32 %v1234, %v1263
        %v1312 = vmul.f32 %v1235, %v1264
        %vm1313 = vcmp.ge.s32.totalorder %v1155, 4
        %vm1314 = vcmp.ge.s32.totalorder %v1156, 4
        %vm1315 = vcmp.ge.s32.totalorder %v1157, 4
        %vm1316 = vcmp.ge.s32.totalorder %v1158, 4
        %v1317 = vrot.slane %v1305, 4
        %v1318 = vrot.slane %v1306, 4
        %v1319 = vrot.slane %v1307, 4
        %v1320 = vrot.slane %v1308, 4
        %v1321 = vrot.slane %v1309, 4
        %v1322 = vrot.slane %v1310, 4
        %v1323 = vrot.slane %v1311, 4
        %v1324 = vrot.slane %v1312, 4
        %vm1325 = vcmp.lt.s32.totalorder %v1107, 4
        %v1326 = vsel %vm1325, %v1321, %v1323
        %v1327 = vsel %vm1325, %v1322, %v1324
        %v1328 = vsel %vm1325, %v1319, %v1321
        %v1329 = vsel %vm1325, %v1320, %v1322
        %v1330 = vsel %vm1325, %v1317, %v1319
        %v1331 = vsel %vm1325, %v1318, %v1320
        %v1332 = vsel %vm1325, %v1323, %v1317
        %v1333 = vsel %vm1325, %v1324, %v1318
        %v1334 = vsel %vm1313, %v1332, 1.0
        %v1335 = vsel %vm1313, %v1333, 1.0
        %v1336 = vsel %vm1314, %v1330, 1.0
        %v1337 = vsel %vm1314, %v1331, 1.0
        %v1338 = vsel %vm1315, %v1328, 1.0
        %v1339 = vsel %vm1315, %v1329, 1.0
        %v1340 = vsel %vm1316, %v1326, 1.0
        %v1341 = vsel %vm1316, %v1327, 1.0
        %v1342 = vrot.slane %v1297, 4
        %v1343 = vrot.slane %v1298, 4
        %v1344 = vrot.slane %v1299, 4
        %v1345 = vrot.slane %v1300, 4
        %v1346 = vrot.slane %v1301, 4
        %v1347 = vrot.slane %v1302, 4
        %v1348 = vrot.slane %v1303, 4
        %v1349 = vrot.slane %v1304, 4
        %v1350 = vsel %vm1325, %v1346, %v1348
        %v1351 = vsel %vm1325, %v1347, %v1349
        %v1352 = vsel %vm1325, %v1344, %v1346
        %v1353 = vsel %vm1325, %v1345, %v1347
        %v1354 = vsel %vm1325, %v1342, %v1344
        %v1355 = vsel %vm1325, %v1343, %v1345
        %v1356 = vsel %vm1325, %v1348, %v1342
        %v1357 = vsel %vm1325, %v1349, %v1343
        %v1358 = vsel %vm1313, %v1356, 0.0
        %v1359 = vsel %vm1313, %v1357, 0.0
        %v1360 = vsel %vm1314, %v1354, 0.0
        %v1361 = vsel %vm1314, %v1355, 0.0
        %v1362 = vsel %vm1315, %v1352, 0.0
        %v1363 = vsel %vm1315, %v1353, 0.0
        %v1364 = vsel %vm1316, %v1350, 0.0
        %v1365 = vsel %vm1316, %v1351, 0.0
        %v1366 = vmul.f32 %v1305, %v1358
        %v1367 = vmul.f32 %v1306, %v1359
        %v1368 = vmul.f32 %v1307, %v1360
        %v1369 = vmul.f32 %v1308, %v1361
        %v1370 = vmul.f32 %v1309, %v1362
        %v1371 = vmul.f32 %v1310, %v1363
        %v1372 = vmul.f32 %v1311, %v1364
        %v1373 = vmul.f32 %v1312, %v1365
        %v1374 = vadd.f32 %v1366, %v1297
        %v1375 = vadd.f32 %v1367, %v1298
        %v1376 = vadd.f32 %v1368, %v1299
        %v1377 = vadd.f32 %v1369, %v1300
        %v1378 = vadd.f32 %v1370, %v1301
        %v1379 = vadd.f32 %v1371, %v1302
        %v1380 = vadd.f32 %v1372, %v1303
        %v1381 = vadd.f32 %v1373, %v1304
        %v1382 = vmul.f32 %v1305, %v1334
        %v1383 = vmul.f32 %v1306, %v1335
        %v1384 = vmul.f32 %v1307, %v1336
        %v1385 = vmul.f32 %v1308, %v1337
        %v1386 = vmul.f32 %v1309, %v1338
        %v1387 = vmul.f32 %v1310, %v1339
        %v1388 = vmul.f32 %v1311, %v1340
        %v1389 = vmul.f32 %v1312, %v1341
        %vm1390 = vcmp.ge.s32.totalorder %v1155, 8
        %vm1391 = vcmp.ge.s32.totalorder %v1156, 8
        %vm1392 = vcmp.ge.s32.totalorder %v1157, 8
        %vm1393 = vcmp.ge.s32.totalorder %v1158, 8
        %v1394 = vsel %vm1390, %v1380, 0.0
        %v1395 = vsel %vm1390, %v1381, 0.0
        %v1396 = vsel %vm1391, %v1374, 0.0
        %v1397 = vsel %vm1391, %v1375, 0.0
        %v1398 = vsel %vm1392, %v1376, 0.0
        %v1399 = vsel %vm1392, %v1377, 0.0
        %v1400 = vsel %vm1393, %v1378, 0.0
        %v1401 = vsel %vm1393, %v1379, 0.0
        %v1402 = vmul.f32 %v1382, %v1394
        %v1403 = vmul.f32 %v1383, %v1395
        %v1404 = vmul.f32 %v1384, %v1396
        %v1405 = vmul.f32 %v1385, %v1397
        %v1406 = vmul.f32 %v1386, %v1398
        %v1407 = vmul.f32 %v1387, %v1399
        %v1408 = vmul.f32 %v1388, %v1400
        %v1409 = vmul.f32 %v1389, %v1401
        %v1410 = vadd.f32 %v1402, %v1374
        %v1411 = vadd.f32 %v1403, %v1375
        %v1412 = vadd.f32 %v1404, %v1376
        %v1413 = vadd.f32 %v1405, %v1377
        %v1414 = vadd.f32 %v1406, %v1378
        %v1415 = vadd.f32 %v1407, %v1379
        %v1416 = vadd.f32 %v1408, %v1380
        %v1417 = vadd.f32 %v1409, %v1381
        %v1418 = vxor.u32 %v785, 2147483648
        %v1419 = vxor.u32 %v787, 2147483648
        %v1420 = vxor.u32 %v789, 2147483648
        %v1421 = vxor.u32 %v791, 2147483648
        %v1422 = vxor.u32 %v795, 2147483648
        %v1423 = vxor.u32 %v797, 2147483648
        %v1424 = vxor.u32 %v799, 2147483648
        %v1425 = vxor.u32 %v801, 2147483648
        %v1426 = vmul.f32 %v1418, 1.442695
        %v1427 = vpow.pop %v1426
        %v1428 = vmul.f32 %v1419, 1.442695
        %v1429 = vpow.pop %v1428
        %v1430 = vmul.f32 %v1420, 1.442695
        %v1431 = vpow.pop %v1430
        %v1432 = vmul.f32 %v1421, 1.442695
        %v1433 = vpow.pop %v1432
        %v1434 = vmul.f32 %v1422, 1.442695
        %v1435 = vpow.pop %v1434
        %v1436 = vmul.f32 %v1423, 1.442695
        %v1437 = vpow.pop %v1436
        %v1438 = vmul.f32 %v1424, 1.442695
        %v1439 = vpow.pop %v1438
        %v1440 = vmul.f32 %v1425, 1.442695
        %v1441 = vpow.pop %v1440
        %v1442 = vadd.f32 %v1427, 1.0
        %v1443 = vadd.f32 %v1429, 1.0
        %v1444 = vadd.f32 %v1431, 1.0
        %v1445 = vadd.f32 %v1433, 1.0
        %v1446 = vadd.f32 %v1435, 1.0
        %v1447 = vadd.f32 %v1437, 1.0
        %v1448 = vadd.f32 %v1439, 1.0
        %v1449 = vadd.f32 %v1441, 1.0
        %v1450 = vrcp.pop %v1442
        %v1451 = vmul.f32 1.0, %v1450
        %v1452 = vrcp.pop %v1443
        %v1453 = vmul.f32 1.0, %v1452
        %v1454 = vrcp.pop %v1444
        %v1455 = vmul.f32 1.0, %v1454
        %v1456 = vrcp.pop %v1445
        %v1457 = vmul.f32 1.0, %v1456
        %v1458 = vrcp.pop %v1446
        %v1459 = vmul.f32 1.0, %v1458
        %v1460 = vrcp.pop %v1447
        %v1461 = vmul.f32 1.0, %v1460
        %v1462 = vrcp.pop %v1448
        %v1463 = vmul.f32 1.0, %v1462
        %v1464 = vrcp.pop %v1449
        %v1465 = vmul.f32 1.0, %v1464
        %v1466 = vmul.f32 %v785, %v1451
        %v1467 = vmul.f32 %v787, %v1453
        %v1468 = vmul.f32 %v789, %v1455
        %v1469 = vmul.f32 %v791, %v1457
        %v1470 = vmul.f32 %v795, %v1459
        %v1471 = vmul.f32 %v797, %v1461
        %v1472 = vmul.f32 %v799, %v1463
        %v1473 = vmul.f32 %v801, %v1465
        %v1474 = vmul.f32 %v1410, %v1466
        %v1475 = vmul.f32 %v1411, %v1467
        %v1476 = vmul.f32 %v1412, %v1468
        %v1477 = vmul.f32 %v1413, %v1469
        %v1478 = vmul.f32 %v1414, %v1470
        %v1479 = vmul.f32 %v1415, %v1471
        %v1480 = vmul.f32 %v1416, %v1472
        %v1481 = vmul.f32 %v1417, %v1473
        %v1482 = vpack.c.bf16 %v1476, %v1474
        %v1483 = vpack.c.bf16 %v1477, %v1475
        %v1484 = vpack.c.bf16 %v1480, %v1478
        %v1485 = vpack.c.bf16 %v1481, %v1479
        %v1486 = vld [vmem:[%s254] sm:$0xf]
        %v1487 = vld [vmem:[%s254 + $0x4] sm:$0xf]
        %v1488 = vld [vmem:[%s254 + $0x8] sm:$0xf]
        %v1489 = vld [vmem:[%s254 + $0xc] sm:$0xf]
        %v1490 = vld [vmem:[%s254 + $0x10] sm:$0xf]
        %v1491 = vld [vmem:[%s254 + $0x14] sm:$0xf]
        %v1492 = vld [vmem:[%s254 + $0x18] sm:$0xf]
        %v1493 = vld [vmem:[%s254 + $0x1c] sm:$0xf]
        %v1494 = vld [vmem:[%s254 + $0x20] sm:$0xf]
        %v1495 = vld [vmem:[%s254 + $0x24] sm:$0xf]
        %v1496 = vld [vmem:[%s254 + $0x28] sm:$0xf]
        %v1497 = vld [vmem:[%s254 + $0x2c] sm:$0xf]
        %v1498 = vld [vmem:[%s254 + $0x30] sm:$0xf]
        %v1499 = vld [vmem:[%s254 + $0x34] sm:$0xf]
        %v1500 = vld [vmem:[%s254 + $0x38] sm:$0xf]
        %v1501 = vld [vmem:[%s254 + $0x3c] sm:$0xf]
        %v1502 = vld [vmem:[%s254 + $0x40] sm:$0xf]
        %v1503 = vld [vmem:[%s254 + $0x44] sm:$0xf]
        %v1504 = vld [vmem:[%s254 + $0x48] sm:$0xf]
        %v1505 = vld [vmem:[%s254 + $0x4c] sm:$0xf]
        %v1506 = vld [vmem:[%s254 + $0x50] sm:$0xf]
        %v1507 = vld [vmem:[%s254 + $0x54] sm:$0xf]
        %v1508 = vld [vmem:[%s254 + $0x58] sm:$0xf]
        %v1509 = vld [vmem:[%s254 + $0x5c] sm:$0xf]
        %v1510 = vld [vmem:[%s254 + $0x60] sm:$0xf]
        %v1511 = vld [vmem:[%s254 + $0x64] sm:$0xf]
        %v1512 = vld [vmem:[%s254 + $0x68] sm:$0xf]
        %v1513 = vld [vmem:[%s254 + $0x6c] sm:$0xf]
        %v1514 = vld [vmem:[%s254 + $0x70] sm:$0xf]
        %v1515 = vld [vmem:[%s254 + $0x74] sm:$0xf]
        %v1516 = vld [vmem:[%s254 + $0x78] sm:$0xf]
        %v1517 = vld [vmem:[%s254 + $0x7c] sm:$0xf]
        %v1550 = vunpack.c.l.b16 %v1486
        %v1551 = vunpack.c.l.b16 %v1487
        %v1552 = vunpack.c.l.b16 %v1488
        %v1553 = vunpack.c.l.b16 %v1489
        %v1554 = vunpack.c.l.b16 %v1490
        %v1555 = vunpack.c.l.b16 %v1491
        %v1556 = vunpack.c.l.b16 %v1492
        %v1557 = vunpack.c.l.b16 %v1493
        %v1558 = vunpack.c.l.b16 %v1494
        %v1559 = vunpack.c.l.b16 %v1495
        %v1560 = vunpack.c.l.b16 %v1496
        %v1561 = vunpack.c.l.b16 %v1497
        %v1562 = vunpack.c.l.b16 %v1498
        %v1563 = vunpack.c.l.b16 %v1499
        %v1564 = vunpack.c.l.b16 %v1500
        %v1565 = vunpack.c.l.b16 %v1501
        %v1566 = vunpack.c.l.b16 %v1502
        %v1567 = vunpack.c.l.b16 %v1503
        %v1568 = vunpack.c.l.b16 %v1504
        %v1569 = vunpack.c.l.b16 %v1505
        %v1570 = vunpack.c.l.b16 %v1506
        %v1571 = vunpack.c.l.b16 %v1507
        %v1572 = vunpack.c.l.b16 %v1508
        %v1573 = vunpack.c.l.b16 %v1509
        %v1574 = vunpack.c.l.b16 %v1510
        %v1575 = vunpack.c.l.b16 %v1511
        %v1576 = vunpack.c.l.b16 %v1512
        %v1577 = vunpack.c.l.b16 %v1513
        %v1578 = vunpack.c.l.b16 %v1514
        %v1579 = vunpack.c.l.b16 %v1515
        %v1580 = vunpack.c.l.b16 %v1516
        %v1581 = vunpack.c.l.b16 %v1517
        %v1582 = vpack.c.b16 %v1551, %v1550
        %v1583 = vpack.c.b16 %v1553, %v1552
        %v1584 = vpack.c.b16 %v1555, %v1554
        %v1585 = vpack.c.b16 %v1557, %v1556
        %v1586 = vpack.c.b16 %v1559, %v1558
        %v1587 = vpack.c.b16 %v1561, %v1560
        %v1588 = vpack.c.b16 %v1563, %v1562
        %v1589 = vpack.c.b16 %v1565, %v1564
        %v1590 = vpack.c.b16 %v1567, %v1566
        %v1591 = vpack.c.b16 %v1569, %v1568
        %v1592 = vpack.c.b16 %v1571, %v1570
        %v1593 = vpack.c.b16 %v1573, %v1572
        %v1594 = vpack.c.b16 %v1575, %v1574
        %v1595 = vpack.c.b16 %v1577, %v1576
        %v1596 = vpack.c.b16 %v1579, %v1578
        %v1597 = vpack.c.b16 %v1581, %v1580
        %1614 = vmatprep.subr.bf16.mxu0 0
        %1615 = vmatpush1.bf16.msra.mxu0 %v1582
        %1616 = vmatprep.subr.bf16.mxu0 0
        %1617 = vmatpush1.bf16.msra.mxu0 %v1583
        %1618 = vmatprep.subr.bf16.mxu0 0
        %1619 = vmatpush1.bf16.msra.mxu0 %v1584
        %1620 = vmatprep.subr.bf16.mxu0 0
        %1621 = vmatpush1.bf16.msra.mxu0 %v1585
        %1622 = vmatprep.subr.bf16.mxu0 0
        %1623 = vmatpush1.bf16.msra.mxu0 %v1586
        %1624 = vmatprep.subr.bf16.mxu0 0
        %1625 = vmatpush1.bf16.msra.mxu0 %v1587
        %1626 = vmatprep.subr.bf16.mxu0 0
        %1627 = vmatpush1.bf16.msra.mxu0 %v1588
        %1628 = vmatprep.subr.bf16.mxu0 0
        %1629 = vmatpush1.bf16.msra.mxu0 %v1589
        %1630 = vmatprep.subr.bf16.mxu0 0
        %1631 = vmatpush1.bf16.msra.mxu0 %v1590
        %1632 = vmatprep.subr.bf16.mxu0 0
        %1633 = vmatpush1.bf16.msra.mxu0 %v1591
        %1634 = vmatprep.subr.bf16.mxu0 0
        %1635 = vmatpush1.bf16.msra.mxu0 %v1592
        %1636 = vmatprep.subr.bf16.mxu0 0
        %1637 = vmatpush1.bf16.msra.mxu0 %v1593
        %1638 = vmatprep.subr.bf16.mxu0 0
        %1639 = vmatpush1.bf16.msra.mxu0 %v1594
        %1640 = vmatprep.subr.bf16.mxu0 0
        %1641 = vmatpush1.bf16.msra.mxu0 %v1595
        %1642 = vmatprep.subr.bf16.mxu0 0
        %1643 = vmatpush1.bf16.msra.mxu0 %v1596
        %1644 = vmatprep.subr.bf16.mxu0 0
        %1645 = vmatpush1.bf16.msra.mxu0 %v1597
        %1646 = vmatprep.mubr.bf16.mxu0 %v1483
        %1647 = vmatmul.mubr.bf16.gmra.mrb[0].mxu0 %v1482
        %v1648 = vpop.f32.mrb[0].mxu0
        %v1649 = vadd.f32 0.0, %v1648
        %v1650 = vpop.f32.mrb[0].mxu0
        %v1651 = vpop.f32.mrb[0].mxu0
        %v1652 = vadd.f32 0.0, %v1651
        %v1653 = vpop.f32.mrb[0].mxu0
        %1654 = vmatprep.mubr.bf16.mxu0 %v1485
        %1655 = vmatmul.mubr.bf16.gmra.mrb[0].mxu0 %v1484
        %v1656 = vpop.f32.mrb[0].mxu0
        %v1657 = vadd.f32 0.0, %v1656
        %v1658 = vpop.f32.mrb[0].mxu0
        %v1659 = vpop.f32.mrb[0].mxu0
        %v1660 = vadd.f32 0.0, %v1659
        %v1661 = vpop.f32.mrb[0].mxu0
        %1662 = vdwg.mxu0
        %v1663 = vadd.f32 %v320, %v1649
        %v1664 = vadd.f32 %v321, %v1652
        %v1665 = vadd.f32 %v322, %v1657
        %v1666 = vadd.f32 %v323, %v1660
        %1667 = vst [vmem:[%s305] sm:$0xff] %v1663
        %1668 = vst [vmem:[%s305 + $0x8] sm:$0xff] %v1664
        %1669 = vst [vmem:[%s305 + $0x10] sm:$0xff] %v1665
        %1670 = vst [vmem:[%s305 + $0x18] sm:$0xff] %v1666
        %s1671 = smul.u32 4, %s25
        %p1672 = scmp.lt.s32.totalorder %s1671, 7
        %s1673 = scalar_select %p1672, %s1671, 7
        %s1674 = smul.addr %s1673, 8
        %s1675 = scalar_lea.vmem %s4, %s1674
        // Predicated region
        $region49: #{base_min_lstm_forward.1} parent=35 // pred_check
          %p1676 = pneg %p155
        $region50: #{base_min_lstm_forward.1} parent=35 // pred_check_branch
          %1678 = sbr.rel (%p1676) target = $region52
        $region51: #{base_min_lstm_forward.1} parent=35 // pred_region
          %s1679 = smul.u32 4, %s25
        $region52: #{base_min_lstm_forward.1} parent=35 // pred_fallthru
          _
      $region36: #{base_min_lstm_forward.1} parent=5 // pred_fallthru
        _
      %p1680 = scmp.le.s32.totalorder 2, %s16
      // Predicated region
      $region53: #{base_min_lstm_forward.1} parent=5 // pred_check
        %p1681 = pneg %p1680
      $region54: #{base_min_lstm_forward.1} parent=5 // pred_check_branch
        %1683 = sbr.rel (%p1681) target = $region56
      $region55: #{base_min_lstm_forward.1} parent=5 // pred_region
        %s1684 = ssub.s32 %s16, 2
        // Predicated region
        $region57: #{base_min_lstm_forward.1} parent=55 // pred_check
          %p1685 = pneg %p161
        $region58: #{base_min_lstm_forward.1} parent=55 // pred_check_branch
          %1687 = sbr.rel (%p1685) target = $region60
        $region59: #{base_min_lstm_forward.1} parent=55 // pred_region
          %s1688 = smul.u32 4, %s27
          %p1689 = scmp.lt.s32.totalorder %s1688, 7
          %s1690 = scalar_select %p1689, %s1688, 7
          %s1691 = smul.addr %s1690, 8
          %s1692 = scalar_lea.vmem %s4, %s1691
        $region60: #{base_min_lstm_forward.1} parent=55 // pred_fallthru
          _
      $region56: #{base_min_lstm_forward.1} parent=5 // pred_fallthru
        _
    $region6: #{base_min_lstm_forward.1} parent=1 // loop_footer
      %s20 = sadd.s32 1, %s16
    $region7: #{base_min_lstm_forward.1} parent=1 // loop_footer_branch
      %15 = sbr.rel target = $region3
    $region8: #{base_min_lstm_forward.1} parent=1 // loop_exit
      _
    %1693 = vsyncpa [#allocation3], 1
    %s1694 = scalar_lea.sflag [#allocation3], 1
    %1695 = vsyncpa %s1694, 1
    %1696 = vsyncpa [#allocation5], 1
    %s1697 = scalar_lea.sflag [#allocation5], 1
    %1698 = vsyncpa %s1697, 1

</llo_original>
